<compile_context>
chip_gen: v5e
topology: v5e:2x2
jax: 0.10.0
libtpu: 0.0.40
codegen_flags: <defaults>
</compile_context>

<pallas_src>
import jax
import jax.numpy as jnp
from jax import lax
from jax.experimental import pallas as pl
from jax.experimental.pallas import tpu as pltpu


# ----------------------------------------------------------------------------
# Fused kernel:  per-timestep gn_ab MLP + gi0 projection (pipelined over T)
#                -> (last step) 2-layer GRU recurrence -> gn_encoder Linear
# ----------------------------------------------------------------------------
def _make_fused_kernel(T, N, S, H):
    H2, H3, H4 = 2 * H, 3 * H, 4 * H
    f32 = jnp.float32
    bf16 = jnp.bfloat16

    def kernel(x_ref, z_ref,
               w1_ref, b1_ref, w2_ref, b2_ref, w3_ref, b3_ref,
               wih0_ref, bih0_ref, whh0_ref, bhh0_ref,
               wa1_ref, wb1_ref, bstk1_ref,
               encw_ref, encb_ref,
               outz_ref, outh_ref,
               gi0_ref):
        t = pl.program_id(0)

        # ---- phase 1 (every grid step): gn_ab MLP + hoisted GRU layer-0 input
        # projection for this timestep's (N, S) slab. bf16 MXU operands,
        # f32 accumulation; post-dot math stays f32.
        x = x_ref[...].astype(bf16)                                          # (N, S)
        h = jnp.dot(x, w1_ref[...], preferred_element_type=f32) + b1_ref[...]
        h = jnp.maximum(h, 0.0)
        h = jnp.dot(h.astype(bf16), w2_ref[...], preferred_element_type=f32) + b2_ref[...]
        h = jnp.maximum(h, 0.0)
        emb = jnp.dot(h.astype(bf16), w3_ref[...], preferred_element_type=f32) + b3_ref[...]
        gi0 = (jnp.dot(emb.astype(bf16), wih0_ref[...], preferred_element_type=f32)
               + bih0_ref[...])                                              # (N, 3H)
        row0 = pl.multiple_of(t * N, N)
        gi0_ref[pl.ds(row0, N), :] = gi0

        # ---- phase 2 (last grid step only): recurrence + encoder + outputs ----
        @pl.when(t == T - 1)
        def _():
            whh0 = whh0_ref[...]
            wa1 = wa1_ref[...]
            wb1 = wb1_ref[...]
            # Hoisted broadcasts: one broadcast each, not T on the serial path.
            bhh0_b = jnp.broadcast_to(bhh0_ref[...], (N, H3))
            bstk1_b = jnp.broadcast_to(bstk1_ref[...], (N, H4))

            def step(tt, carry):
                h0, h1 = carry
                r0w = pl.multiple_of(tt * N, N)
                gi = gi0_ref[pl.ds(r0w, N), :]                               # (N, 3H)
                # layer 0 — only the hidden projection is on the serial path
                gh0 = jnp.dot(h0, whh0, preferred_element_type=f32) + bhh0_b
                rz0 = jax.nn.sigmoid(gi[:, :H2] + gh0[:, :H2])
                r0, z0 = rz0[:, :H], rz0[:, H:]
                n0 = jnp.tanh(gi[:, H2:] + r0 * gh0[:, H2:])                 # b_hh_n inside r*()
                h0 = (1.0 - z0) * n0 + z0 * h0
                # layer 1 — two MXU dots, NO lane-concat of [h0, h1]
                g1 = (jnp.dot(h0, wa1, preferred_element_type=f32)
                      + jnp.dot(h1, wb1, preferred_element_type=f32) + bstk1_b)
                rz1 = jax.nn.sigmoid(g1[:, :H2])
                r1, z1 = rz1[:, :H], rz1[:, H:]
                n1 = jnp.tanh(g1[:, H2:H3] + r1 * g1[:, H3:H4])
                h1 = (1.0 - z1) * n1 + z1 * h1
                return (h0, h1)

            h0 = jnp.zeros((N, H), f32)
            h1 = jnp.zeros((N, H), f32)
            h0, h1 = lax.fori_loop(0, T, step, (h0, h1), unroll=True)

            # gn_encoder (single Linear); outputs written separately (no in-kernel
            # lane-concat -> lane-dense stores), wrapper concatenates.
            z_enc = (jnp.dot(z_ref[...], encw_ref[...], preferred_element_type=f32)
                     + encb_ref[...])                                        # (N, Z)
            outz_ref[...] = z_enc.astype(outz_ref.dtype)
            outh_ref[...] = h1.astype(outh_ref.dtype)

    return kernel


@jax.jit
def cf_encoder_com_forward(cf, z, params):
    """cf: (B, T, K, S) counterfactual rollouts;  z: (B, K, S) current state."""
    B, T, K, S = cf.shape
    N = B * K
    H = params["gru_whh0"].shape[0]
    Z = params["enc_w"].shape[1]
    f32, bf16 = jnp.float32, jnp.bfloat16

    # One-time reorder of the tiny raw input so each timestep's (B*K, S) slab is
    # a contiguous, sublane-aligned row block the grid BlockSpec can DMA per step.
    x_tm = jnp.transpose(cf, (1, 0, 2, 3)).reshape(T * N, S)
    z_flat = z.reshape(N, S)

    # bf16 weights for the batched MXU matmuls (MLP + gi0 projection), cast once.
    w1 = params["ab_w1"].astype(bf16)
    w2 = params["ab_w2"].astype(bf16)
    w3 = params["ab_w3"].astype(bf16)
    wih0 = params["gru_wih0"].astype(bf16)

    # GRU layer-1 weights restructured so the recurrent cell is two MXU dots:
    #   g1 = h0 @ w_a + h1 @ w_b + b_stk  ->  [r | z | i_n | h_n]
    wih1, whh1 = params["gru_wih1"], params["gru_whh1"]
    bih1, bhh1 = params["gru_bih1"], params["gru_bhh1"]
    zeros = jnp.zeros((H, H), f32)
    w_a = jnp.concatenate([wih1[:, :2 * H], wih1[:, 2 * H:], zeros], axis=1)   # (H, 4H)
    w_b = jnp.concatenate([whh1[:, :2 * H], zeros, whh1[:, 2 * H:]], axis=1)   # (H, 4H)
    b_stk = jnp.concatenate([bih1[:, :2 * H] + bhh1[:, :2 * H],
                             bih1[:, 2 * H:], bhh1[:, 2 * H:]], axis=1)        # (1, 4H)

    operands = (
        x_tm, z_flat,
        w1, params["ab_b1"], w2, params["ab_b2"], w3, params["ab_b3"],
        wih0, params["gru_bih0"], params["gru_whh0"], params["gru_bhh0"],
        w_a, w_b, b_stk,
        params["enc_w"], params["enc_b"],
    )

    def full_block(a):
        nd = a.ndim
        return pl.BlockSpec(a.shape, lambda t, _nd=nd: (0,) * _nd)

    in_specs = [pl.BlockSpec((N, S), lambda t: (t, 0))]        # x_tm: row slab per t
    in_specs += [full_block(a) for a in operands[1:]]          # weights: resident

    out_z, out_h = pl.pallas_call(
        _make_fused_kernel(T, N, S, H),
        grid=(T,),
        out_shape=(jax.ShapeDtypeStruct((N, Z), f32),
                   jax.ShapeDtypeStruct((N, H), f32)),
        in_specs=in_specs,
        out_specs=(pl.BlockSpec((N, Z), lambda t: (0, 0)),
                   pl.BlockSpec((N, H), lambda t: (0, 0))),
        scratch_shapes=[pltpu.VMEM((T * N, 3 * H), f32)],      # gi0 pre-activations
        compiler_params=pltpu.CompilerParams(
            dimension_semantics=("arbitrary",)),               # last step depends on all prior
    )(*operands)

    # Lane-concat epilogue moved out of the kernel.
    return jnp.concatenate([out_z, out_h], axis=-1).reshape(B, K, Z + H)


# ----------------------------------------------------------------------------
# Pure-JAX reference (same math, un-fused, f32 HIGHEST) for a correctness check.
# Tolerance 2e-2 covers the deliberate bf16 cast of the batched MLP/projection
# matmuls (observed error is a few 1e-3 at these scales).
# ----------------------------------------------------------------------------
def cf_encoder_com_reference(cf, z, params):
    B, T, K, S = cf.shape
    E = params["ab_w3"].shape[1]
    H = params["gru_whh0"].shape[0]
    hp = lambda a, b: jnp.dot(a, b, precision=jax.lax.Precision.HIGHEST)

    x = cf.reshape(B * T * K, S)
    h = jax.nn.relu(hp(x, params["ab_w1"]) + params["ab_b1"])
    h = jax.nn.relu(hp(h, params["ab_w2"]) + params["ab_b2"])
    emb = (hp(h, params["ab_w3"]) + params["ab_b3"]).reshape(B, T, K, E)
    seq = jnp.transpose(emb, (0, 2, 1, 3)).reshape(B * K, T, E)

    def cell(x_t, h_t, wih, whh, bih, bhh):
        gi = hp(x_t, wih) + bih
        gh = hp(h_t, whh) + bhh
        r = jax.nn.sigmoid(gi[:, :H] + gh[:, :H])
        zz = jax.nn.sigmoid(gi[:, H:2 * H] + gh[:, H:2 * H])
        n = jnp.tanh(gi[:, 2 * H:] + r * gh[:, 2 * H:])
        return (1.0 - zz) * n + zz * h_t

    h0 = jnp.zeros((B * K, H), jnp.float32)
    h1 = jnp.zeros((B * K, H), jnp.float32)
    for t in range(T):
        h0 = cell(seq[:, t], h0, params["gru_wih0"], params["gru_whh0"],
                  params["gru_bih0"], params["gru_bhh0"])
        h1 = cell(h0, h1, params["gru_wih1"], params["gru_whh1"],
                  params["gru_bih1"], params["gru_bhh1"])
    U = h1.reshape(B, K, H)
    z_enc = (hp(z.reshape(B * K, S), params["enc_w"])
             + params["enc_b"]).reshape(B, K, -1)
    return jnp.concatenate([z_enc, U], axis=-1)


# ----------------------------------------------------------------------------
# Deterministic synthetic parameters
# ----------------------------------------------------------------------------
def init_params(key, *, state_size, z_size, cf_size, emb_size, hidden_size):
    ks = jax.random.split(key, 16)
    s = 0.1
    return {
        # gn_ab : Linear(S,hid)+ReLU, Linear(hid,hid)+ReLU, Linear(hid,emb)
        "ab_w1": s * jax.random.normal(ks[0], (state_size, hidden_size), jnp.float32),
        "ab_b1": s * jax.random.normal(ks[1], (1, hidden_size), jnp.float32),
        "ab_w2": s * jax.random.normal(ks[2], (hidden_size, hidden_size), jnp.float32),
        "ab_b2": s * jax.random.normal(ks[3], (1, hidden_size), jnp.float32),
        "ab_w3": s * jax.random.normal(ks[4], (hidden_size, emb_size), jnp.float32),
        "ab_b3": s * jax.random.normal(ks[5], (1, emb_size), jnp.float32),
        # gn_encoder : Linear(S, z_size)   (n_layers = 0)
        "enc_w": s * jax.random.normal(ks[6], (state_size, z_size), jnp.float32),
        "enc_b": s * jax.random.normal(ks[7], (1, z_size), jnp.float32),
        # GRU layer 0 (emb_size -> cf_size), gates packed (r, z, n)
        "gru_wih0": s * jax.random.normal(ks[8], (emb_size, 3 * cf_size), jnp.float32),
        "gru_whh0": s * jax.random.normal(ks[9], (cf_size, 3 * cf_size), jnp.float32),
        "gru_bih0": s * jax.random.normal(ks[10], (1, 3 * cf_size), jnp.float32),
        "gru_bhh0": s * jax.random.normal(ks[11], (1, 3 * cf_size), jnp.float32),
        # GRU layer 1 (cf_size -> cf_size)
        "gru_wih1": s * jax.random.normal(ks[12], (cf_size, 3 * cf_size), jnp.float32),
        "gru_whh1": s * jax.random.normal(ks[13], (cf_size, 3 * cf_size), jnp.float32),
        "gru_bih1": s * jax.random.normal(ks[14], (1, 3 * cf_size), jnp.float32),
        "gru_bhh1": s * jax.random.normal(ks[15], (1, 3 * cf_size), jnp.float32),
    }


if __name__ == "__main__":
    # Module hyper-params
    z_size, state_size, cf_size = 8, 16, 16
    n_layers, hidden_size, emb_size = 2, 32, 16
    # Small example shapes
    B, T, K = 2, 8, 4

    key = jax.random.PRNGKey(0)
    k_cf, k_z, k_p = jax.random.split(key, 3)
    cf = jax.random.normal(k_cf, (B, T, K, state_size), jnp.float32)
    z = jax.random.normal(k_z, (B, K, state_size), jnp.float32)

    params = init_params(k_p, state_size=state_size, z_size=z_size,
                         cf_size=cf_size, emb_size=emb_size,
                         hidden_size=hidden_size)

    out = cf_encoder_com_forward(cf, z, params)
    out = jax.block_until_ready(out)
    assert out.shape == (B, K, z_size + cf_size), out.shape

    ref = cf_encoder_com_reference(cf, z, params)
    err = float(jnp.max(jnp.abs(out - ref)))
    assert err < 2e-2, f"max abs err vs reference: {err}"

    print("KERNEL_OK")
</pallas_src>

<mosaic_0001>
module attributes {stable_mosaic.version = 11 : i64} {
  func.func @kernel(%arg0: i32, %arg1: memref<8x16xf32, #tpu.memory_space<vmem>>, %arg2: memref<8x16xf32, #tpu.memory_space<vmem>>, %arg3: memref<16x32xbf16, #tpu.memory_space<vmem>>, %arg4: memref<1x32xf32, #tpu.memory_space<vmem>>, %arg5: memref<32x32xbf16, #tpu.memory_space<vmem>>, %arg6: memref<1x32xf32, #tpu.memory_space<vmem>>, %arg7: memref<32x16xbf16, #tpu.memory_space<vmem>>, %arg8: memref<1x16xf32, #tpu.memory_space<vmem>>, %arg9: memref<16x48xbf16, #tpu.memory_space<vmem>>, %arg10: memref<1x48xf32, #tpu.memory_space<vmem>>, %arg11: memref<16x48xf32, #tpu.memory_space<vmem>>, %arg12: memref<1x48xf32, #tpu.memory_space<vmem>>, %arg13: memref<16x64xf32, #tpu.memory_space<vmem>>, %arg14: memref<16x64xf32, #tpu.memory_space<vmem>>, %arg15: memref<1x64xf32, #tpu.memory_space<vmem>>, %arg16: memref<16x8xf32, #tpu.memory_space<vmem>>, %arg17: memref<1x8xf32, #tpu.memory_space<vmem>>, %arg18: memref<8x8xf32, #tpu.memory_space<vmem>>, %arg19: memref<8x16xf32, #tpu.memory_space<vmem>>, %arg20: memref<64x48xf32, #tpu.memory_space<vmem>>) attributes {dimension_semantics = [#tpu.dimension_semantics<arbitrary>], iteration_bounds = array<i64: 8>, scalar_prefetch = 0 : i64, scratch_operands = 1 : i64, tpu.core_type = #tpu.core_type<tc>, window_params = [{transform_indices = @transform_0, window_bounds = array<i64: 8, 16>}, {pipeline_mode = #tpu.pipeline_mode<synchronous>, transform_indices = @transform_1, window_bounds = array<i64: 8, 16>}, {pipeline_mode = #tpu.pipeline_mode<synchronous>, transform_indices = @transform_2, window_bounds = array<i64: 16, 32>}, {pipeline_mode = #tpu.pipeline_mode<synchronous>, transform_indices = @transform_3, window_bounds = array<i64: 1, 32>}, {pipeline_mode = #tpu.pipeline_mode<synchronous>, transform_indices = @transform_4, window_bounds = array<i64: 32, 32>}, {pipeline_mode = #tpu.pipeline_mode<synchronous>, transform_indices = @transform_5, window_bounds = array<i64: 1, 32>}, {pipeline_mode = #tpu.pipeline_mode<synchronous>, transform_indices = @transform_6, window_bounds = array<i64: 32, 16>}, {pipeline_mode = #tpu.pipeline_mode<synchronous>, transform_indices = @transform_7, window_bounds = array<i64: 1, 16>}, {pipeline_mode = #tpu.pipeline_mode<synchronous>, transform_indices = @transform_8, window_bounds = array<i64: 16, 48>}, {pipeline_mode = #tpu.pipeline_mode<synchronous>, transform_indices = @transform_9, window_bounds = array<i64: 1, 48>}, {pipeline_mode = #tpu.pipeline_mode<synchronous>, transform_indices = @transform_10, window_bounds = array<i64: 16, 48>}, {pipeline_mode = #tpu.pipeline_mode<synchronous>, transform_indices = @transform_11, window_bounds = array<i64: 1, 48>}, {pipeline_mode = #tpu.pipeline_mode<synchronous>, transform_indices = @transform_12, window_bounds = array<i64: 16, 64>}, {pipeline_mode = #tpu.pipeline_mode<synchronous>, transform_indices = @transform_13, window_bounds = array<i64: 16, 64>}, {pipeline_mode = #tpu.pipeline_mode<synchronous>, transform_indices = @transform_14, window_bounds = array<i64: 1, 64>}, {pipeline_mode = #tpu.pipeline_mode<synchronous>, transform_indices = @transform_15, window_bounds = array<i64: 16, 8>}, {pipeline_mode = #tpu.pipeline_mode<synchronous>, transform_indices = @transform_16, window_bounds = array<i64: 1, 8>}, {pipeline_mode = #tpu.pipeline_mode<synchronous>, transform_indices = @transform_17, window_bounds = array<i64: 8, 8>}, {pipeline_mode = #tpu.pipeline_mode<synchronous>, transform_indices = @transform_18, window_bounds = array<i64: 8, 16>}]} {
    %c0 = arith.constant 0 : index
    %c0_0 = arith.constant 0 : index
    %0 = vector.load %arg1[%c0, %c0_0] : memref<8x16xf32, #tpu.memory_space<vmem>>, vector<8x16xf32>
    %1 = arith.truncf %0 : vector<8x16xf32> to vector<8x16xbf16>
    %c0_1 = arith.constant 0 : index
    %c0_2 = arith.constant 0 : index
    %2 = vector.load %arg3[%c0_1, %c0_2] : memref<16x32xbf16, #tpu.memory_space<vmem>>, vector<16x32xbf16>
    %cst = arith.constant dense<0.000000e+00> : vector<8x32xf32>
    %3 = tpu.matmul %1, %2, %cst {dimension_numbers = #tpu.dot_dimension_numbers<[1], [0], [0], [1], [0, 0, 1, 1], [], []>} : vector<8x16xbf16>, vector<16x32xbf16>, vector<8x32xf32> -> vector<8x32xf32>
    %c0_3 = arith.constant 0 : index
    %c0_4 = arith.constant 0 : index
    %4 = vector.load %arg4[%c0_3, %c0_4] : memref<1x32xf32, #tpu.memory_space<vmem>>, vector<1x32xf32>
    %5 = vector.broadcast %4 : vector<1x32xf32> to vector<8x32xf32>
    %6 = arith.addf %3, %5 : vector<8x32xf32>
    %cst_5 = arith.constant 0.000000e+00 : f32
    %7 = vector.broadcast %cst_5 : f32 to vector<8x32xf32>
    %8 = arith.maximumf %6, %7 : vector<8x32xf32>
    %9 = arith.truncf %8 : vector<8x32xf32> to vector<8x32xbf16>
    %c0_6 = arith.constant 0 : index
    %c0_7 = arith.constant 0 : index
    %10 = vector.load %arg5[%c0_6, %c0_7] : memref<32x32xbf16, #tpu.memory_space<vmem>>, vector<32x32xbf16>
    %cst_8 = arith.constant dense<0.000000e+00> : vector<8x32xf32>
    %11 = tpu.matmul %9, %10, %cst_8 {dimension_numbers = #tpu.dot_dimension_numbers<[1], [0], [0], [1], [0, 0, 1, 1], [], []>} : vector<8x32xbf16>, vector<32x32xbf16>, vector<8x32xf32> -> vector<8x32xf32>
    %c0_9 = arith.constant 0 : index
    %c0_10 = arith.constant 0 : index
    %12 = vector.load %arg6[%c0_9, %c0_10] : memref<1x32xf32, #tpu.memory_space<vmem>>, vector<1x32xf32>
    %13 = vector.broadcast %12 : vector<1x32xf32> to vector<8x32xf32>
    %14 = arith.addf %11, %13 : vector<8x32xf32>
    %cst_11 = arith.constant 0.000000e+00 : f32
    %15 = vector.broadcast %cst_11 : f32 to vector<8x32xf32>
    %16 = arith.maximumf %14, %15 : vector<8x32xf32>
    %17 = arith.truncf %16 : vector<8x32xf32> to vector<8x32xbf16>
    %c0_12 = arith.constant 0 : index
    %c0_13 = arith.constant 0 : index
    %18 = vector.load %arg7[%c0_12, %c0_13] : memref<32x16xbf16, #tpu.memory_space<vmem>>, vector<32x16xbf16>
    %cst_14 = arith.constant dense<0.000000e+00> : vector<8x16xf32>
    %19 = tpu.matmul %17, %18, %cst_14 {dimension_numbers = #tpu.dot_dimension_numbers<[1], [0], [0], [1], [0, 0, 1, 1], [], []>} : vector<8x32xbf16>, vector<32x16xbf16>, vector<8x16xf32> -> vector<8x16xf32>
    %c0_15 = arith.constant 0 : index
    %c0_16 = arith.constant 0 : index
    %20 = vector.load %arg8[%c0_15, %c0_16] : memref<1x16xf32, #tpu.memory_space<vmem>>, vector<1x16xf32>
    %21 = vector.broadcast %20 : vector<1x16xf32> to vector<8x16xf32>
    %22 = arith.addf %19, %21 : vector<8x16xf32>
    %23 = arith.truncf %22 : vector<8x16xf32> to vector<8x16xbf16>
    %c0_17 = arith.constant 0 : index
    %c0_18 = arith.constant 0 : index
    %24 = vector.load %arg9[%c0_17, %c0_18] : memref<16x48xbf16, #tpu.memory_space<vmem>>, vector<16x48xbf16>
    %cst_19 = arith.constant dense<0.000000e+00> : vector<8x48xf32>
    %25 = tpu.matmul %23, %24, %cst_19 {dimension_numbers = #tpu.dot_dimension_numbers<[1], [0], [0], [1], [0, 0, 1, 1], [], []>} : vector<8x16xbf16>, vector<16x48xbf16>, vector<8x48xf32> -> vector<8x48xf32>
    %c0_20 = arith.constant 0 : index
    %c0_21 = arith.constant 0 : index
    %26 = vector.load %arg10[%c0_20, %c0_21] : memref<1x48xf32, #tpu.memory_space<vmem>>, vector<1x48xf32>
    %27 = vector.broadcast %26 : vector<1x48xf32> to vector<8x48xf32>
    %28 = arith.addf %25, %27 : vector<8x48xf32>
    %c8_i32 = arith.constant 8 : i32
    %29 = arith.muli %arg0, %c8_i32 : i32
    %30 = tpu.assume_multiple %29, 8 : i32
    %31 = arith.index_cast %30 : i32 to index
    %c0_22 = arith.constant 0 : index
    %32 = vector.load %arg20[%31, %c0_22] : memref<64x48xf32, #tpu.memory_space<vmem>>, vector<8x48xf32>
    tpu.vector_store %arg20[%31, %c0_22], %28 {strides = array<i32>} : memref<64x48xf32, #tpu.memory_space<vmem>>, vector<8x48xf32>,
    %c7_i32 = arith.constant 7 : i32
    %33 = arith.cmpi eq, %arg0, %c7_i32 : i32
    %34 = arith.extui %33 : i1 to i32
    %c0_i32 = arith.constant 0 : i32
    %35 = arith.cmpi ne, %34, %c0_i32 : i32
    scf.if %35 {
      %c0_23 = arith.constant 0 : index
      %c0_24 = arith.constant 0 : index
      %36 = vector.load %arg11[%c0_23, %c0_24] : memref<16x48xf32, #tpu.memory_space<vmem>>, vector<16x48xf32>
      %c0_25 = arith.constant 0 : index
      %c0_26 = arith.constant 0 : index
      %37 = vector.load %arg13[%c0_25, %c0_26] : memref<16x64xf32, #tpu.memory_space<vmem>>, vector<16x64xf32>
      %c0_27 = arith.constant 0 : index
      %c0_28 = arith.constant 0 : index
      %38 = vector.load %arg14[%c0_27, %c0_28] : memref<16x64xf32, #tpu.memory_space<vmem>>, vector<16x64xf32>
      %c0_29 = arith.constant 0 : index
      %c0_30 = arith.constant 0 : index
      %39 = vector.load %arg12[%c0_29, %c0_30] : memref<1x48xf32, #tpu.memory_space<vmem>>, vector<1x48xf32>
      %40 = vector.shape_cast %39 : vector<1x48xf32> to vector<1x48xf32>
      %41 = vector.broadcast %40 : vector<1x48xf32> to vector<8x48xf32>
      %c0_31 = arith.constant 0 : index
      %c0_32 = arith.constant 0 : index
      %42 = vector.load %arg15[%c0_31, %c0_32] : memref<1x64xf32, #tpu.memory_space<vmem>>, vector<1x64xf32>
      %43 = vector.shape_cast %42 : vector<1x64xf32> to vector<1x64xf32>
      %44 = vector.broadcast %43 : vector<1x64xf32> to vector<8x64xf32>
      %cst_33 = arith.constant 0.000000e+00 : f32
      %45 = vector.broadcast %cst_33 : f32 to vector<8x16xf32>
      %cst_34 = arith.constant 0.000000e+00 : f32
      %46 = vector.broadcast %cst_34 : f32 to vector<8x16xf32>
      %c0_i32_35 = arith.constant 0 : i32
      %c8_i32_36 = arith.constant 8 : i32
      %47 = arith.muli %c0_i32_35, %c8_i32_36 : i32
      %48 = tpu.assume_multiple %47, 8 : i32
      %49 = arith.index_cast %48 : i32 to index
      %c0_37 = arith.constant 0 : index
      %50 = vector.load %arg20[%49, %c0_37] : memref<64x48xf32, #tpu.memory_space<vmem>>, vector<8x48xf32>
      %cst_38 = arith.constant dense<0.000000e+00> : vector<8x48xf32>
      %51 = tpu.matmul %45, %36, %cst_38 {dimension_numbers = #tpu.dot_dimension_numbers<[1], [0], [0], [1], [0, 0, 1, 1], [], []>} : vector<8x16xf32>, vector<16x48xf32>, vector<8x48xf32> -> vector<8x48xf32>
      %52 = arith.addf %51, %41 : vector<8x48xf32>
      %53 = vector.extract_strided_slice %50 {offsets = [0, 0], sizes = [8, 32], strides = [1, 1]} : vector<8x48xf32> to vector<8x32xf32>
      %54 = vector.extract_strided_slice %52 {offsets = [0, 0], sizes = [8, 32], strides = [1, 1]} : vector<8x48xf32> to vector<8x32xf32>
      %55 = arith.addf %53, %54 : vector<8x32xf32>
      %56 = arith.negf %55 : vector<8x32xf32>
      %57 = math.exp %56 : vector<8x32xf32>
      %cst_39 = arith.constant 1.000000e+00 : f32
      %58 = vector.broadcast %cst_39 : f32 to vector<8x32xf32>
      %59 = arith.addf %58, %57 : vector<8x32xf32>
      %60 = arith.divf %58, %59 : vector<8x32xf32>
      %61 = vector.extract_strided_slice %60 {offsets = [0, 0], sizes = [8, 16], strides = [1, 1]} : vector<8x32xf32> to vector<8x16xf32>
      %62 = vector.extract_strided_slice %60 {offsets = [0, 16], sizes = [8, 16], strides = [1, 1]} : vector<8x32xf32> to vector<8x16xf32>
      %63 = vector.extract_strided_slice %50 {offsets = [0, 32], sizes = [8, 16], strides = [1, 1]} : vector<8x48xf32> to vector<8x16xf32>
      %64 = vector.extract_strided_slice %52 {offsets = [0, 32], sizes = [8, 16], strides = [1, 1]} : vector<8x48xf32> to vector<8x16xf32>
      %65 = arith.mulf %61, %64 : vector<8x16xf32>
      %66 = arith.addf %63, %65 : vector<8x16xf32>
      %67 = math.tanh %66 : vector<8x16xf32>
      %cst_40 = arith.constant 1.000000e+00 : f32
      %68 = vector.broadcast %cst_40 : f32 to vector<8x16xf32>
      %69 = arith.subf %68, %62 : vector<8x16xf32>
      %70 = arith.mulf %69, %67 : vector<8x16xf32>
      %71 = arith.mulf %62, %45 : vector<8x16xf32>
      %72 = arith.addf %70, %71 : vector<8x16xf32>
      %cst_41 = arith.constant dense<0.000000e+00> : vector<8x64xf32>
      %73 = tpu.matmul %72, %37, %cst_41 {dimension_numbers = #tpu.dot_dimension_numbers<[1], [0], [0], [1], [0, 0, 1, 1], [], []>} : vector<8x16xf32>, vector<16x64xf32>, vector<8x64xf32> -> vector<8x64xf32>
      %cst_42 = arith.constant dense<0.000000e+00> : vector<8x64xf32>
      %74 = tpu.matmul %46, %38, %cst_42 {dimension_numbers = #tpu.dot_dimension_numbers<[1], [0], [0], [1], [0, 0, 1, 1], [], []>} : vector<8x16xf32>, vector<16x64xf32>, vector<8x64xf32> -> vector<8x64xf32>
      %75 = arith.addf %73, %74 : vector<8x64xf32>
      %76 = arith.addf %75, %44 : vector<8x64xf32>
      %77 = vector.extract_strided_slice %76 {offsets = [0, 0], sizes = [8, 32], strides = [1, 1]} : vector<8x64xf32> to vector<8x32xf32>
      %78 = arith.negf %77 : vector<8x32xf32>
      %79 = math.exp %78 : vector<8x32xf32>
      %cst_43 = arith.constant 1.000000e+00 : f32
      %80 = vector.broadcast %cst_43 : f32 to vector<8x32xf32>
      %81 = arith.addf %80, %79 : vector<8x32xf32>
      %82 = arith.divf %80, %81 : vector<8x32xf32>
      %83 = vector.extract_strided_slice %82 {offsets = [0, 0], sizes = [8, 16], strides = [1, 1]} : vector<8x32xf32> to vector<8x16xf32>
      %84 = vector.extract_strided_slice %82 {offsets = [0, 16], sizes = [8, 16], strides = [1, 1]} : vector<8x32xf32> to vector<8x16xf32>
      %85 = vector.extract_strided_slice %76 {offsets = [0, 32], sizes = [8, 16], strides = [1, 1]} : vector<8x64xf32> to vector<8x16xf32>
      %86 = vector.extract_strided_slice %76 {offsets = [0, 48], sizes = [8, 16], strides = [1, 1]} : vector<8x64xf32> to vector<8x16xf32>
      %87 = arith.mulf %83, %86 : vector<8x16xf32>
      %88 = arith.addf %85, %87 : vector<8x16xf32>
      %89 = math.tanh %88 : vector<8x16xf32>
      %cst_44 = arith.constant 1.000000e+00 : f32
      %90 = vector.broadcast %cst_44 : f32 to vector<8x16xf32>
      %91 = arith.subf %90, %84 : vector<8x16xf32>
      %92 = arith.mulf %91, %89 : vector<8x16xf32>
      %93 = arith.mulf %84, %46 : vector<8x16xf32>
      %94 = arith.addf %92, %93 : vector<8x16xf32>
      %c1_i32 = arith.constant 1 : i32
      %c8_i32_45 = arith.constant 8 : i32
      %95 = arith.muli %c1_i32, %c8_i32_45 : i32
      %96 = tpu.assume_multiple %95, 8 : i32
      %97 = arith.index_cast %96 : i32 to index
      %c0_46 = arith.constant 0 : index
      %98 = vector.load %arg20[%97, %c0_46] : memref<64x48xf32, #tpu.memory_space<vmem>>, vector<8x48xf32>
      %cst_47 = arith.constant dense<0.000000e+00> : vector<8x48xf32>
      %99 = tpu.matmul %72, %36, %cst_47 {dimension_numbers = #tpu.dot_dimension_numbers<[1], [0], [0], [1], [0, 0, 1, 1], [], []>} : vector<8x16xf32>, vector<16x48xf32>, vector<8x48xf32> -> vector<8x48xf32>
      %100 = arith.addf %99, %41 : vector<8x48xf32>
      %101 = vector.extract_strided_slice %98 {offsets = [0, 0], sizes = [8, 32], strides = [1, 1]} : vector<8x48xf32> to vector<8x32xf32>
      %102 = vector.extract_strided_slice %100 {offsets = [0, 0], sizes = [8, 32], strides = [1, 1]} : vector<8x48xf32> to vector<8x32xf32>
      %103 = arith.addf %101, %102 : vector<8x32xf32>
      %104 = arith.negf %103 : vector<8x32xf32>
      %105 = math.exp %104 : vector<8x32xf32>
      %cst_48 = arith.constant 1.000000e+00 : f32
      %106 = vector.broadcast %cst_48 : f32 to vector<8x32xf32>
      %107 = arith.addf %106, %105 : vector<8x32xf32>
      %108 = arith.divf %106, %107 : vector<8x32xf32>
      %109 = vector.extract_strided_slice %108 {offsets = [0, 0], sizes = [8, 16], strides = [1, 1]} : vector<8x32xf32> to vector<8x16xf32>
      %110 = vector.extract_strided_slice %108 {offsets = [0, 16], sizes = [8, 16], strides = [1, 1]} : vector<8x32xf32> to vector<8x16xf32>
      %111 = vector.extract_strided_slice %98 {offsets = [0, 32], sizes = [8, 16], strides = [1, 1]} : vector<8x48xf32> to vector<8x16xf32>
      %112 = vector.extract_strided_slice %100 {offsets = [0, 32], sizes = [8, 16], strides = [1, 1]} : vector<8x48xf32> to vector<8x16xf32>
      %113 = arith.mulf %109, %112 : vector<8x16xf32>
      %114 = arith.addf %111, %113 : vector<8x16xf32>
      %115 = math.tanh %114 : vector<8x16xf32>
      %cst_49 = arith.constant 1.000000e+00 : f32
      %116 = vector.broadcast %cst_49 : f32 to vector<8x16xf32>
      %117 = arith.subf %116, %110 : vector<8x16xf32>
      %118 = arith.mulf %117, %115 : vector<8x16xf32>
      %119 = arith.mulf %110, %72 : vector<8x16xf32>
      %120 = arith.addf %118, %119 : vector<8x16xf32>
      %cst_50 = arith.constant dense<0.000000e+00> : vector<8x64xf32>
      %121 = tpu.matmul %120, %37, %cst_50 {dimension_numbers = #tpu.dot_dimension_numbers<[1], [0], [0], [1], [0, 0, 1, 1], [], []>} : vector<8x16xf32>, vector<16x64xf32>, vector<8x64xf32> -> vector<8x64xf32>
      %cst_51 = arith.constant dense<0.000000e+00> : vector<8x64xf32>
      %122 = tpu.matmul %94, %38, %cst_51 {dimension_numbers = #tpu.dot_dimension_numbers<[1], [0], [0], [1], [0, 0, 1, 1], [], []>} : vector<8x16xf32>, vector<16x64xf32>, vector<8x64xf32> -> vector<8x64xf32>
      %123 = arith.addf %121, %122 : vector<8x64xf32>
      %124 = arith.addf %123, %44 : vector<8x64xf32>
      %125 = vector.extract_strided_slice %124 {offsets = [0, 0], sizes = [8, 32], strides = [1, 1]} : vector<8x64xf32> to vector<8x32xf32>
      %126 = arith.negf %125 : vector<8x32xf32>
      %127 = math.exp %126 : vector<8x32xf32>
      %cst_52 = arith.constant 1.000000e+00 : f32
      %128 = vector.broadcast %cst_52 : f32 to vector<8x32xf32>
      %129 = arith.addf %128, %127 : vector<8x32xf32>
      %130 = arith.divf %128, %129 : vector<8x32xf32>
      %131 = vector.extract_strided_slice %130 {offsets = [0, 0], sizes = [8, 16], strides = [1, 1]} : vector<8x32xf32> to vector<8x16xf32>
      %132 = vector.extract_strided_slice %130 {offsets = [0, 16], sizes = [8, 16], strides = [1, 1]} : vector<8x32xf32> to vector<8x16xf32>
      %133 = vector.extract_strided_slice %124 {offsets = [0, 32], sizes = [8, 16], strides = [1, 1]} : vector<8x64xf32> to vector<8x16xf32>
      %134 = vector.extract_strided_slice %124 {offsets = [0, 48], sizes = [8, 16], strides = [1, 1]} : vector<8x64xf32> to vector<8x16xf32>
      %135 = arith.mulf %131, %134 : vector<8x16xf32>
      %136 = arith.addf %133, %135 : vector<8x16xf32>
      %137 = math.tanh %136 : vector<8x16xf32>
      %cst_53 = arith.constant 1.000000e+00 : f32
      %138 = vector.broadcast %cst_53 : f32 to vector<8x16xf32>
      %139 = arith.subf %138, %132 : vector<8x16xf32>
      %140 = arith.mulf %139, %137 : vector<8x16xf32>
      %141 = arith.mulf %132, %94 : vector<8x16xf32>
      %142 = arith.addf %140, %141 : vector<8x16xf32>
      %c2_i32 = arith.constant 2 : i32
      %c8_i32_54 = arith.constant 8 : i32
      %143 = arith.muli %c2_i32, %c8_i32_54 : i32
      %144 = tpu.assume_multiple %143, 8 : i32
      %145 = arith.index_cast %144 : i32 to index
      %c0_55 = arith.constant 0 : index
      %146 = vector.load %arg20[%145, %c0_55] : memref<64x48xf32, #tpu.memory_space<vmem>>, vector<8x48xf32>
      %cst_56 = arith.constant dense<0.000000e+00> : vector<8x48xf32>
      %147 = tpu.matmul %120, %36, %cst_56 {dimension_numbers = #tpu.dot_dimension_numbers<[1], [0], [0], [1], [0, 0, 1, 1], [], []>} : vector<8x16xf32>, vector<16x48xf32>, vector<8x48xf32> -> vector<8x48xf32>
      %148 = arith.addf %147, %41 : vector<8x48xf32>
      %149 = vector.extract_strided_slice %146 {offsets = [0, 0], sizes = [8, 32], strides = [1, 1]} : vector<8x48xf32> to vector<8x32xf32>
      %150 = vector.extract_strided_slice %148 {offsets = [0, 0], sizes = [8, 32], strides = [1, 1]} : vector<8x48xf32> to vector<8x32xf32>
      %151 = arith.addf %149, %150 : vector<8x32xf32>
      %152 = arith.negf %151 : vector<8x32xf32>
      %153 = math.exp %152 : vector<8x32xf32>
      %cst_57 = arith.constant 1.000000e+00 : f32
      %154 = vector.broadcast %cst_57 : f32 to vector<8x32xf32>
      %155 = arith.addf %154, %153 : vector<8x32xf32>
      %156 = arith.divf %154, %155 : vector<8x32xf32>
      %157 = vector.extract_strided_slice %156 {offsets = [0, 0], sizes = [8, 16], strides = [1, 1]} : vector<8x32xf32> to vector<8x16xf32>
      %158 = vector.extract_strided_slice %156 {offsets = [0, 16], sizes = [8, 16], strides = [1, 1]} : vector<8x32xf32> to vector<8x16xf32>
      %159 = vector.extract_strided_slice %146 {offsets = [0, 32], sizes = [8, 16], strides = [1, 1]} : vector<8x48xf32> to vector<8x16xf32>
      %160 = vector.extract_strided_slice %148 {offsets = [0, 32], sizes = [8, 16], strides = [1, 1]} : vector<8x48xf32> to vector<8x16xf32>
      %161 = arith.mulf %157, %160 : vector<8x16xf32>
      %162 = arith.addf %159, %161 : vector<8x16xf32>
      %163 = math.tanh %162 : vector<8x16xf32>
      %cst_58 = arith.constant 1.000000e+00 : f32
      %164 = vector.broadcast %cst_58 : f32 to vector<8x16xf32>
      %165 = arith.subf %164, %158 : vector<8x16xf32>
      %166 = arith.mulf %165, %163 : vector<8x16xf32>
      %167 = arith.mulf %158, %120 : vector<8x16xf32>
      %168 = arith.addf %166, %167 : vector<8x16xf32>
      %cst_59 = arith.constant dense<0.000000e+00> : vector<8x64xf32>
      %169 = tpu.matmul %168, %37, %cst_59 {dimension_numbers = #tpu.dot_dimension_numbers<[1], [0], [0], [1], [0, 0, 1, 1], [], []>} : vector<8x16xf32>, vector<16x64xf32>, vector<8x64xf32> -> vector<8x64xf32>
      %cst_60 = arith.constant dense<0.000000e+00> : vector<8x64xf32>
      %170 = tpu.matmul %142, %38, %cst_60 {dimension_numbers = #tpu.dot_dimension_numbers<[1], [0], [0], [1], [0, 0, 1, 1], [], []>} : vector<8x16xf32>, vector<16x64xf32>, vector<8x64xf32> -> vector<8x64xf32>
      %171 = arith.addf %169, %170 : vector<8x64xf32>
      %172 = arith.addf %171, %44 : vector<8x64xf32>
      %173 = vector.extract_strided_slice %172 {offsets = [0, 0], sizes = [8, 32], strides = [1, 1]} : vector<8x64xf32> to vector<8x32xf32>
      %174 = arith.negf %173 : vector<8x32xf32>
      %175 = math.exp %174 : vector<8x32xf32>
      %cst_61 = arith.constant 1.000000e+00 : f32
      %176 = vector.broadcast %cst_61 : f32 to vector<8x32xf32>
      %177 = arith.addf %176, %175 : vector<8x32xf32>
      %178 = arith.divf %176, %177 : vector<8x32xf32>
      %179 = vector.extract_strided_slice %178 {offsets = [0, 0], sizes = [8, 16], strides = [1, 1]} : vector<8x32xf32> to vector<8x16xf32>
      %180 = vector.extract_strided_slice %178 {offsets = [0, 16], sizes = [8, 16], strides = [1, 1]} : vector<8x32xf32> to vector<8x16xf32>
      %181 = vector.extract_strided_slice %172 {offsets = [0, 32], sizes = [8, 16], strides = [1, 1]} : vector<8x64xf32> to vector<8x16xf32>
      %182 = vector.extract_strided_slice %172 {offsets = [0, 48], sizes = [8, 16], strides = [1, 1]} : vector<8x64xf32> to vector<8x16xf32>
      %183 = arith.mulf %179, %182 : vector<8x16xf32>
      %184 = arith.addf %181, %183 : vector<8x16xf32>
      %185 = math.tanh %184 : vector<8x16xf32>
      %cst_62 = arith.constant 1.000000e+00 : f32
      %186 = vector.broadcast %cst_62 : f32 to vector<8x16xf32>
      %187 = arith.subf %186, %180 : vector<8x16xf32>
      %188 = arith.mulf %187, %185 : vector<8x16xf32>
      %189 = arith.mulf %180, %142 : vector<8x16xf32>
      %190 = arith.addf %188, %189 : vector<8x16xf32>
      %c3_i32 = arith.constant 3 : i32
      %c8_i32_63 = arith.constant 8 : i32
      %191 = arith.muli %c3_i32, %c8_i32_63 : i32
      %192 = tpu.assume_multiple %191, 8 : i32
      %193 = arith.index_cast %192 : i32 to index
      %c0_64 = arith.constant 0 : index
      %194 = vector.load %arg20[%193, %c0_64] : memref<64x48xf32, #tpu.memory_space<vmem>>, vector<8x48xf32>
      %cst_65 = arith.constant dense<0.000000e+00> : vector<8x48xf32>
      %195 = tpu.matmul %168, %36, %cst_65 {dimension_numbers = #tpu.dot_dimension_numbers<[1], [0], [0], [1], [0, 0, 1, 1], [], []>} : vector<8x16xf32>, vector<16x48xf32>, vector<8x48xf32> -> vector<8x48xf32>
      %196 = arith.addf %195, %41 : vector<8x48xf32>
      %197 = vector.extract_strided_slice %194 {offsets = [0, 0], sizes = [8, 32], strides = [1, 1]} : vector<8x48xf32> to vector<8x32xf32>
      %198 = vector.extract_strided_slice %196 {offsets = [0, 0], sizes = [8, 32], strides = [1, 1]} : vector<8x48xf32> to vector<8x32xf32>
      %199 = arith.addf %197, %198 : vector<8x32xf32>
      %200 = arith.negf %199 : vector<8x32xf32>
      %201 = math.exp %200 : vector<8x32xf32>
      %cst_66 = arith.constant 1.000000e+00 : f32
      %202 = vector.broadcast %cst_66 : f32 to vector<8x32xf32>
      %203 = arith.addf %202, %201 : vector<8x32xf32>
      %204 = arith.divf %202, %203 : vector<8x32xf32>
      %205 = vector.extract_strided_slice %204 {offsets = [0, 0], sizes = [8, 16], strides = [1, 1]} : vector<8x32xf32> to vector<8x16xf32>
      %206 = vector.extract_strided_slice %204 {offsets = [0, 16], sizes = [8, 16], strides = [1, 1]} : vector<8x32xf32> to vector<8x16xf32>
      %207 = vector.extract_strided_slice %194 {offsets = [0, 32], sizes = [8, 16], strides = [1, 1]} : vector<8x48xf32> to vector<8x16xf32>
      %208 = vector.extract_strided_slice %196 {offsets = [0, 32], sizes = [8, 16], strides = [1, 1]} : vector<8x48xf32> to vector<8x16xf32>
      %209 = arith.mulf %205, %208 : vector<8x16xf32>
      %210 = arith.addf %207, %209 : vector<8x16xf32>
      %211 = math.tanh %210 : vector<8x16xf32>
      %cst_67 = arith.constant 1.000000e+00 : f32
      %212 = vector.broadcast %cst_67 : f32 to vector<8x16xf32>
      %213 = arith.subf %212, %206 : vector<8x16xf32>
      %214 = arith.mulf %213, %211 : vector<8x16xf32>
      %215 = arith.mulf %206, %168 : vector<8x16xf32>
      %216 = arith.addf %214, %215 : vector<8x16xf32>
      %cst_68 = arith.constant dense<0.000000e+00> : vector<8x64xf32>
      %217 = tpu.matmul %216, %37, %cst_68 {dimension_numbers = #tpu.dot_dimension_numbers<[1], [0], [0], [1], [0, 0, 1, 1], [], []>} : vector<8x16xf32>, vector<16x64xf32>, vector<8x64xf32> -> vector<8x64xf32>
      %cst_69 = arith.constant dense<0.000000e+00> : vector<8x64xf32>
      %218 = tpu.matmul %190, %38, %cst_69 {dimension_numbers = #tpu.dot_dimension_numbers<[1], [0], [0], [1], [0, 0, 1, 1], [], []>} : vector<8x16xf32>, vector<16x64xf32>, vector<8x64xf32> -> vector<8x64xf32>
      %219 = arith.addf %217, %218 : vector<8x64xf32>
      %220 = arith.addf %219, %44 : vector<8x64xf32>
      %221 = vector.extract_strided_slice %220 {offsets = [0, 0], sizes = [8, 32], strides = [1, 1]} : vector<8x64xf32> to vector<8x32xf32>
      %222 = arith.negf %221 : vector<8x32xf32>
      %223 = math.exp %222 : vector<8x32xf32>
      %cst_70 = arith.constant 1.000000e+00 : f32
      %224 = vector.broadcast %cst_70 : f32 to vector<8x32xf32>
      %225 = arith.addf %224, %223 : vector<8x32xf32>
      %226 = arith.divf %224, %225 : vector<8x32xf32>
      %227 = vector.extract_strided_slice %226 {offsets = [0, 0], sizes = [8, 16], strides = [1, 1]} : vector<8x32xf32> to vector<8x16xf32>
      %228 = vector.extract_strided_slice %226 {offsets = [0, 16], sizes = [8, 16], strides = [1, 1]} : vector<8x32xf32> to vector<8x16xf32>
      %229 = vector.extract_strided_slice %220 {offsets = [0, 32], sizes = [8, 16], strides = [1, 1]} : vector<8x64xf32> to vector<8x16xf32>
      %230 = vector.extract_strided_slice %220 {offsets = [0, 48], sizes = [8, 16], strides = [1, 1]} : vector<8x64xf32> to vector<8x16xf32>
      %231 = arith.mulf %227, %230 : vector<8x16xf32>
      %232 = arith.addf %229, %231 : vector<8x16xf32>
      %233 = math.tanh %232 : vector<8x16xf32>
      %cst_71 = arith.constant 1.000000e+00 : f32
      %234 = vector.broadcast %cst_71 : f32 to vector<8x16xf32>
      %235 = arith.subf %234, %228 : vector<8x16xf32>
      %236 = arith.mulf %235, %233 : vector<8x16xf32>
      %237 = arith.mulf %228, %190 : vector<8x16xf32>
      %238 = arith.addf %236, %237 : vector<8x16xf32>
      %c4_i32 = arith.constant 4 : i32
      %c8_i32_72 = arith.constant 8 : i32
      %239 = arith.muli %c4_i32, %c8_i32_72 : i32
      %240 = tpu.assume_multiple %239, 8 : i32
      %241 = arith.index_cast %240 : i32 to index
      %c0_73 = arith.constant 0 : index
      %242 = vector.load %arg20[%241, %c0_73] : memref<64x48xf32, #tpu.memory_space<vmem>>, vector<8x48xf32>
      %cst_74 = arith.constant dense<0.000000e+00> : vector<8x48xf32>
      %243 = tpu.matmul %216, %36, %cst_74 {dimension_numbers = #tpu.dot_dimension_numbers<[1], [0], [0], [1], [0, 0, 1, 1], [], []>} : vector<8x16xf32>, vector<16x48xf32>, vector<8x48xf32> -> vector<8x48xf32>
      %244 = arith.addf %243, %41 : vector<8x48xf32>
      %245 = vector.extract_strided_slice %242 {offsets = [0, 0], sizes = [8, 32], strides = [1, 1]} : vector<8x48xf32> to vector<8x32xf32>
      %246 = vector.extract_strided_slice %244 {offsets = [0, 0], sizes = [8, 32], strides = [1, 1]} : vector<8x48xf32> to vector<8x32xf32>
      %247 = arith.addf %245, %246 : vector<8x32xf32>
      %248 = arith.negf %247 : vector<8x32xf32>
      %249 = math.exp %248 : vector<8x32xf32>
      %cst_75 = arith.constant 1.000000e+00 : f32
      %250 = vector.broadcast %cst_75 : f32 to vector<8x32xf32>
      %251 = arith.addf %250, %249 : vector<8x32xf32>
      %252 = arith.divf %250, %251 : vector<8x32xf32>
      %253 = vector.extract_strided_slice %252 {offsets = [0, 0], sizes = [8, 16], strides = [1, 1]} : vector<8x32xf32> to vector<8x16xf32>
      %254 = vector.extract_strided_slice %252 {offsets = [0, 16], sizes = [8, 16], strides = [1, 1]} : vector<8x32xf32> to vector<8x16xf32>
      %255 = vector.extract_strided_slice %242 {offsets = [0, 32], sizes = [8, 16], strides = [1, 1]} : vector<8x48xf32> to vector<8x16xf32>
      %256 = vector.extract_strided_slice %244 {offsets = [0, 32], sizes = [8, 16], strides = [1, 1]} : vector<8x48xf32> to vector<8x16xf32>
      %257 = arith.mulf %253, %256 : vector<8x16xf32>
      %258 = arith.addf %255, %257 : vector<8x16xf32>
      %259 = math.tanh %258 : vector<8x16xf32>
      %cst_76 = arith.constant 1.000000e+00 : f32
      %260 = vector.broadcast %cst_76 : f32 to vector<8x16xf32>
      %261 = arith.subf %260, %254 : vector<8x16xf32>
      %262 = arith.mulf %261, %259 : vector<8x16xf32>
      %263 = arith.mulf %254, %216 : vector<8x16xf32>
      %264 = arith.addf %262, %263 : vector<8x16xf32>
      %cst_77 = arith.constant dense<0.000000e+00> : vector<8x64xf32>
      %265 = tpu.matmul %264, %37, %cst_77 {dimension_numbers = #tpu.dot_dimension_numbers<[1], [0], [0], [1], [0, 0, 1, 1], [], []>} : vector<8x16xf32>, vector<16x64xf32>, vector<8x64xf32> -> vector<8x64xf32>
      %cst_78 = arith.constant dense<0.000000e+00> : vector<8x64xf32>
      %266 = tpu.matmul %238, %38, %cst_78 {dimension_numbers = #tpu.dot_dimension_numbers<[1], [0], [0], [1], [0, 0, 1, 1], [], []>} : vector<8x16xf32>, vector<16x64xf32>, vector<8x64xf32> -> vector<8x64xf32>
      %267 = arith.addf %265, %266 : vector<8x64xf32>
      %268 = arith.addf %267, %44 : vector<8x64xf32>
      %269 = vector.extract_strided_slice %268 {offsets = [0, 0], sizes = [8, 32], strides = [1, 1]} : vector<8x64xf32> to vector<8x32xf32>
      %270 = arith.negf %269 : vector<8x32xf32>
      %271 = math.exp %270 : vector<8x32xf32>
      %cst_79 = arith.constant 1.000000e+00 : f32
      %272 = vector.broadcast %cst_79 : f32 to vector<8x32xf32>
      %273 = arith.addf %272, %271 : vector<8x32xf32>
      %274 = arith.divf %272, %273 : vector<8x32xf32>
      %275 = vector.extract_strided_slice %274 {offsets = [0, 0], sizes = [8, 16], strides = [1, 1]} : vector<8x32xf32> to vector<8x16xf32>
      %276 = vector.extract_strided_slice %274 {offsets = [0, 16], sizes = [8, 16], strides = [1, 1]} : vector<8x32xf32> to vector<8x16xf32>
      %277 = vector.extract_strided_slice %268 {offsets = [0, 32], sizes = [8, 16], strides = [1, 1]} : vector<8x64xf32> to vector<8x16xf32>
      %278 = vector.extract_strided_slice %268 {offsets = [0, 48], sizes = [8, 16], strides = [1, 1]} : vector<8x64xf32> to vector<8x16xf32>
      %279 = arith.mulf %275, %278 : vector<8x16xf32>
      %280 = arith.addf %277, %279 : vector<8x16xf32>
      %281 = math.tanh %280 : vector<8x16xf32>
      %cst_80 = arith.constant 1.000000e+00 : f32
      %282 = vector.broadcast %cst_80 : f32 to vector<8x16xf32>
      %283 = arith.subf %282, %276 : vector<8x16xf32>
      %284 = arith.mulf %283, %281 : vector<8x16xf32>
      %285 = arith.mulf %276, %238 : vector<8x16xf32>
      %286 = arith.addf %284, %285 : vector<8x16xf32>
      %c5_i32 = arith.constant 5 : i32
      %c8_i32_81 = arith.constant 8 : i32
      %287 = arith.muli %c5_i32, %c8_i32_81 : i32
      %288 = tpu.assume_multiple %287, 8 : i32
      %289 = arith.index_cast %288 : i32 to index
      %c0_82 = arith.constant 0 : index
      %290 = vector.load %arg20[%289, %c0_82] : memref<64x48xf32, #tpu.memory_space<vmem>>, vector<8x48xf32>
      %cst_83 = arith.constant dense<0.000000e+00> : vector<8x48xf32>
      %291 = tpu.matmul %264, %36, %cst_83 {dimension_numbers = #tpu.dot_dimension_numbers<[1], [0], [0], [1], [0, 0, 1, 1], [], []>} : vector<8x16xf32>, vector<16x48xf32>, vector<8x48xf32> -> vector<8x48xf32>
      %292 = arith.addf %291, %41 : vector<8x48xf32>
      %293 = vector.extract_strided_slice %290 {offsets = [0, 0], sizes = [8, 32], strides = [1, 1]} : vector<8x48xf32> to vector<8x32xf32>
      %294 = vector.extract_strided_slice %292 {offsets = [0, 0], sizes = [8, 32], strides = [1, 1]} : vector<8x48xf32> to vector<8x32xf32>
      %295 = arith.addf %293, %294 : vector<8x32xf32>
      %296 = arith.negf %295 : vector<8x32xf32>
      %297 = math.exp %296 : vector<8x32xf32>
      %cst_84 = arith.constant 1.000000e+00 : f32
      %298 = vector.broadcast %cst_84 : f32 to vector<8x32xf32>
      %299 = arith.addf %298, %297 : vector<8x32xf32>
      %300 = arith.divf %298, %299 : vector<8x32xf32>
      %301 = vector.extract_strided_slice %300 {offsets = [0, 0], sizes = [8, 16], strides = [1, 1]} : vector<8x32xf32> to vector<8x16xf32>
      %302 = vector.extract_strided_slice %300 {offsets = [0, 16], sizes = [8, 16], strides = [1, 1]} : vector<8x32xf32> to vector<8x16xf32>
      %303 = vector.extract_strided_slice %290 {offsets = [0, 32], sizes = [8, 16], strides = [1, 1]} : vector<8x48xf32> to vector<8x16xf32>
      %304 = vector.extract_strided_slice %292 {offsets = [0, 32], sizes = [8, 16], strides = [1, 1]} : vector<8x48xf32> to vector<8x16xf32>
      %305 = arith.mulf %301, %304 : vector<8x16xf32>
      %306 = arith.addf %303, %305 : vector<8x16xf32>
      %307 = math.tanh %306 : vector<8x16xf32>
      %cst_85 = arith.constant 1.000000e+00 : f32
      %308 = vector.broadcast %cst_85 : f32 to vector<8x16xf32>
      %309 = arith.subf %308, %302 : vector<8x16xf32>
      %310 = arith.mulf %309, %307 : vector<8x16xf32>
      %311 = arith.mulf %302, %264 : vector<8x16xf32>
      %312 = arith.addf %310, %311 : vector<8x16xf32>
      %cst_86 = arith.constant dense<0.000000e+00> : vector<8x64xf32>
      %313 = tpu.matmul %312, %37, %cst_86 {dimension_numbers = #tpu.dot_dimension_numbers<[1], [0], [0], [1], [0, 0, 1, 1], [], []>} : vector<8x16xf32>, vector<16x64xf32>, vector<8x64xf32> -> vector<8x64xf32>
      %cst_87 = arith.constant dense<0.000000e+00> : vector<8x64xf32>
      %314 = tpu.matmul %286, %38, %cst_87 {dimension_numbers = #tpu.dot_dimension_numbers<[1], [0], [0], [1], [0, 0, 1, 1], [], []>} : vector<8x16xf32>, vector<16x64xf32>, vector<8x64xf32> -> vector<8x64xf32>
      %315 = arith.addf %313, %314 : vector<8x64xf32>
      %316 = arith.addf %315, %44 : vector<8x64xf32>
      %317 = vector.extract_strided_slice %316 {offsets = [0, 0], sizes = [8, 32], strides = [1, 1]} : vector<8x64xf32> to vector<8x32xf32>
      %318 = arith.negf %317 : vector<8x32xf32>
      %319 = math.exp %318 : vector<8x32xf32>
      %cst_88 = arith.constant 1.000000e+00 : f32
      %320 = vector.broadcast %cst_88 : f32 to vector<8x32xf32>
      %321 = arith.addf %320, %319 : vector<8x32xf32>
      %322 = arith.divf %320, %321 : vector<8x32xf32>
      %323 = vector.extract_strided_slice %322 {offsets = [0, 0], sizes = [8, 16], strides = [1, 1]} : vector<8x32xf32> to vector<8x16xf32>
      %324 = vector.extract_strided_slice %322 {offsets = [0, 16], sizes = [8, 16], strides = [1, 1]} : vector<8x32xf32> to vector<8x16xf32>
      %325 = vector.extract_strided_slice %316 {offsets = [0, 32], sizes = [8, 16], strides = [1, 1]} : vector<8x64xf32> to vector<8x16xf32>
      %326 = vector.extract_strided_slice %316 {offsets = [0, 48], sizes = [8, 16], strides = [1, 1]} : vector<8x64xf32> to vector<8x16xf32>
      %327 = arith.mulf %323, %326 : vector<8x16xf32>
      %328 = arith.addf %325, %327 : vector<8x16xf32>
      %329 = math.tanh %328 : vector<8x16xf32>
      %cst_89 = arith.constant 1.000000e+00 : f32
      %330 = vector.broadcast %cst_89 : f32 to vector<8x16xf32>
      %331 = arith.subf %330, %324 : vector<8x16xf32>
      %332 = arith.mulf %331, %329 : vector<8x16xf32>
      %333 = arith.mulf %324, %286 : vector<8x16xf32>
      %334 = arith.addf %332, %333 : vector<8x16xf32>
      %c6_i32 = arith.constant 6 : i32
      %c8_i32_90 = arith.constant 8 : i32
      %335 = arith.muli %c6_i32, %c8_i32_90 : i32
      %336 = tpu.assume_multiple %335, 8 : i32
      %337 = arith.index_cast %336 : i32 to index
      %c0_91 = arith.constant 0 : index
      %338 = vector.load %arg20[%337, %c0_91] : memref<64x48xf32, #tpu.memory_space<vmem>>, vector<8x48xf32>
      %cst_92 = arith.constant dense<0.000000e+00> : vector<8x48xf32>
      %339 = tpu.matmul %312, %36, %cst_92 {dimension_numbers = #tpu.dot_dimension_numbers<[1], [0], [0], [1], [0, 0, 1, 1], [], []>} : vector<8x16xf32>, vector<16x48xf32>, vector<8x48xf32> -> vector<8x48xf32>
      %340 = arith.addf %339, %41 : vector<8x48xf32>
      %341 = vector.extract_strided_slice %338 {offsets = [0, 0], sizes = [8, 32], strides = [1, 1]} : vector<8x48xf32> to vector<8x32xf32>
      %342 = vector.extract_strided_slice %340 {offsets = [0, 0], sizes = [8, 32], strides = [1, 1]} : vector<8x48xf32> to vector<8x32xf32>
      %343 = arith.addf %341, %342 : vector<8x32xf32>
      %344 = arith.negf %343 : vector<8x32xf32>
      %345 = math.exp %344 : vector<8x32xf32>
      %cst_93 = arith.constant 1.000000e+00 : f32
      %346 = vector.broadcast %cst_93 : f32 to vector<8x32xf32>
      %347 = arith.addf %346, %345 : vector<8x32xf32>
      %348 = arith.divf %346, %347 : vector<8x32xf32>
      %349 = vector.extract_strided_slice %348 {offsets = [0, 0], sizes = [8, 16], strides = [1, 1]} : vector<8x32xf32> to vector<8x16xf32>
      %350 = vector.extract_strided_slice %348 {offsets = [0, 16], sizes = [8, 16], strides = [1, 1]} : vector<8x32xf32> to vector<8x16xf32>
      %351 = vector.extract_strided_slice %338 {offsets = [0, 32], sizes = [8, 16], strides = [1, 1]} : vector<8x48xf32> to vector<8x16xf32>
      %352 = vector.extract_strided_slice %340 {offsets = [0, 32], sizes = [8, 16], strides = [1, 1]} : vector<8x48xf32> to vector<8x16xf32>
      %353 = arith.mulf %349, %352 : vector<8x16xf32>
      %354 = arith.addf %351, %353 : vector<8x16xf32>
      %355 = math.tanh %354 : vector<8x16xf32>
      %cst_94 = arith.constant 1.000000e+00 : f32
      %356 = vector.broadcast %cst_94 : f32 to vector<8x16xf32>
      %357 = arith.subf %356, %350 : vector<8x16xf32>
      %358 = arith.mulf %357, %355 : vector<8x16xf32>
      %359 = arith.mulf %350, %312 : vector<8x16xf32>
      %360 = arith.addf %358, %359 : vector<8x16xf32>
      %cst_95 = arith.constant dense<0.000000e+00> : vector<8x64xf32>
      %361 = tpu.matmul %360, %37, %cst_95 {dimension_numbers = #tpu.dot_dimension_numbers<[1], [0], [0], [1], [0, 0, 1, 1], [], []>} : vector<8x16xf32>, vector<16x64xf32>, vector<8x64xf32> -> vector<8x64xf32>
      %cst_96 = arith.constant dense<0.000000e+00> : vector<8x64xf32>
      %362 = tpu.matmul %334, %38, %cst_96 {dimension_numbers = #tpu.dot_dimension_numbers<[1], [0], [0], [1], [0, 0, 1, 1], [], []>} : vector<8x16xf32>, vector<16x64xf32>, vector<8x64xf32> -> vector<8x64xf32>
      %363 = arith.addf %361, %362 : vector<8x64xf32>
      %364 = arith.addf %363, %44 : vector<8x64xf32>
      %365 = vector.extract_strided_slice %364 {offsets = [0, 0], sizes = [8, 32], strides = [1, 1]} : vector<8x64xf32> to vector<8x32xf32>
      %366 = arith.negf %365 : vector<8x32xf32>
      %367 = math.exp %366 : vector<8x32xf32>
      %cst_97 = arith.constant 1.000000e+00 : f32
      %368 = vector.broadcast %cst_97 : f32 to vector<8x32xf32>
      %369 = arith.addf %368, %367 : vector<8x32xf32>
      %370 = arith.divf %368, %369 : vector<8x32xf32>
      %371 = vector.extract_strided_slice %370 {offsets = [0, 0], sizes = [8, 16], strides = [1, 1]} : vector<8x32xf32> to vector<8x16xf32>
      %372 = vector.extract_strided_slice %370 {offsets = [0, 16], sizes = [8, 16], strides = [1, 1]} : vector<8x32xf32> to vector<8x16xf32>
      %373 = vector.extract_strided_slice %364 {offsets = [0, 32], sizes = [8, 16], strides = [1, 1]} : vector<8x64xf32> to vector<8x16xf32>
      %374 = vector.extract_strided_slice %364 {offsets = [0, 48], sizes = [8, 16], strides = [1, 1]} : vector<8x64xf32> to vector<8x16xf32>
      %375 = arith.mulf %371, %374 : vector<8x16xf32>
      %376 = arith.addf %373, %375 : vector<8x16xf32>
      %377 = math.tanh %376 : vector<8x16xf32>
      %cst_98 = arith.constant 1.000000e+00 : f32
      %378 = vector.broadcast %cst_98 : f32 to vector<8x16xf32>
      %379 = arith.subf %378, %372 : vector<8x16xf32>
      %380 = arith.mulf %379, %377 : vector<8x16xf32>
      %381 = arith.mulf %372, %334 : vector<8x16xf32>
      %382 = arith.addf %380, %381 : vector<8x16xf32>
      %c7_i32_99 = arith.constant 7 : i32
      %c8_i32_100 = arith.constant 8 : i32
      %383 = arith.muli %c7_i32_99, %c8_i32_100 : i32
      %384 = tpu.assume_multiple %383, 8 : i32
      %385 = arith.index_cast %384 : i32 to index
      %c0_101 = arith.constant 0 : index
      %386 = vector.load %arg20[%385, %c0_101] : memref<64x48xf32, #tpu.memory_space<vmem>>, vector<8x48xf32>
      %cst_102 = arith.constant dense<0.000000e+00> : vector<8x48xf32>
      %387 = tpu.matmul %360, %36, %cst_102 {dimension_numbers = #tpu.dot_dimension_numbers<[1], [0], [0], [1], [0, 0, 1, 1], [], []>} : vector<8x16xf32>, vector<16x48xf32>, vector<8x48xf32> -> vector<8x48xf32>
      %388 = arith.addf %387, %41 : vector<8x48xf32>
      %389 = vector.extract_strided_slice %386 {offsets = [0, 0], sizes = [8, 32], strides = [1, 1]} : vector<8x48xf32> to vector<8x32xf32>
      %390 = vector.extract_strided_slice %388 {offsets = [0, 0], sizes = [8, 32], strides = [1, 1]} : vector<8x48xf32> to vector<8x32xf32>
      %391 = arith.addf %389, %390 : vector<8x32xf32>
      %392 = arith.negf %391 : vector<8x32xf32>
      %393 = math.exp %392 : vector<8x32xf32>
      %cst_103 = arith.constant 1.000000e+00 : f32
      %394 = vector.broadcast %cst_103 : f32 to vector<8x32xf32>
      %395 = arith.addf %394, %393 : vector<8x32xf32>
      %396 = arith.divf %394, %395 : vector<8x32xf32>
      %397 = vector.extract_strided_slice %396 {offsets = [0, 0], sizes = [8, 16], strides = [1, 1]} : vector<8x32xf32> to vector<8x16xf32>
      %398 = vector.extract_strided_slice %396 {offsets = [0, 16], sizes = [8, 16], strides = [1, 1]} : vector<8x32xf32> to vector<8x16xf32>
      %399 = vector.extract_strided_slice %386 {offsets = [0, 32], sizes = [8, 16], strides = [1, 1]} : vector<8x48xf32> to vector<8x16xf32>
      %400 = vector.extract_strided_slice %388 {offsets = [0, 32], sizes = [8, 16], strides = [1, 1]} : vector<8x48xf32> to vector<8x16xf32>
      %401 = arith.mulf %397, %400 : vector<8x16xf32>
      %402 = arith.addf %399, %401 : vector<8x16xf32>
      %403 = math.tanh %402 : vector<8x16xf32>
      %cst_104 = arith.constant 1.000000e+00 : f32
      %404 = vector.broadcast %cst_104 : f32 to vector<8x16xf32>
      %405 = arith.subf %404, %398 : vector<8x16xf32>
      %406 = arith.mulf %405, %403 : vector<8x16xf32>
      %407 = arith.mulf %398, %360 : vector<8x16xf32>
      %408 = arith.addf %406, %407 : vector<8x16xf32>
      %cst_105 = arith.constant dense<0.000000e+00> : vector<8x64xf32>
      %409 = tpu.matmul %408, %37, %cst_105 {dimension_numbers = #tpu.dot_dimension_numbers<[1], [0], [0], [1], [0, 0, 1, 1], [], []>} : vector<8x16xf32>, vector<16x64xf32>, vector<8x64xf32> -> vector<8x64xf32>
      %cst_106 = arith.constant dense<0.000000e+00> : vector<8x64xf32>
      %410 = tpu.matmul %382, %38, %cst_106 {dimension_numbers = #tpu.dot_dimension_numbers<[1], [0], [0], [1], [0, 0, 1, 1], [], []>} : vector<8x16xf32>, vector<16x64xf32>, vector<8x64xf32> -> vector<8x64xf32>
      %411 = arith.addf %409, %410 : vector<8x64xf32>
      %412 = arith.addf %411, %44 : vector<8x64xf32>
      %413 = vector.extract_strided_slice %412 {offsets = [0, 0], sizes = [8, 32], strides = [1, 1]} : vector<8x64xf32> to vector<8x32xf32>
      %414 = arith.negf %413 : vector<8x32xf32>
      %415 = math.exp %414 : vector<8x32xf32>
      %cst_107 = arith.constant 1.000000e+00 : f32
      %416 = vector.broadcast %cst_107 : f32 to vector<8x32xf32>
      %417 = arith.addf %416, %415 : vector<8x32xf32>
      %418 = arith.divf %416, %417 : vector<8x32xf32>
      %419 = vector.extract_strided_slice %418 {offsets = [0, 0], sizes = [8, 16], strides = [1, 1]} : vector<8x32xf32> to vector<8x16xf32>
      %420 = vector.extract_strided_slice %418 {offsets = [0, 16], sizes = [8, 16], strides = [1, 1]} : vector<8x32xf32> to vector<8x16xf32>
      %421 = vector.extract_strided_slice %412 {offsets = [0, 32], sizes = [8, 16], strides = [1, 1]} : vector<8x64xf32> to vector<8x16xf32>
      %422 = vector.extract_strided_slice %412 {offsets = [0, 48], sizes = [8, 16], strides = [1, 1]} : vector<8x64xf32> to vector<8x16xf32>
      %423 = arith.mulf %419, %422 : vector<8x16xf32>
      %424 = arith.addf %421, %423 : vector<8x16xf32>
      %425 = math.tanh %424 : vector<8x16xf32>
      %cst_108 = arith.constant 1.000000e+00 : f32
      %426 = vector.broadcast %cst_108 : f32 to vector<8x16xf32>
      %427 = arith.subf %426, %420 : vector<8x16xf32>
      %428 = arith.mulf %427, %425 : vector<8x16xf32>
      %429 = arith.mulf %420, %382 : vector<8x16xf32>
      %430 = arith.addf %428, %429 : vector<8x16xf32>
      %c8_i32_109 = arith.constant 8 : i32
      %c0_110 = arith.constant 0 : index
      %c0_111 = arith.constant 0 : index
      %431 = vector.load %arg2[%c0_110, %c0_111] : memref<8x16xf32, #tpu.memory_space<vmem>>, vector<8x16xf32>
      %c0_112 = arith.constant 0 : index
      %c0_113 = arith.constant 0 : index
      %432 = vector.load %arg16[%c0_112, %c0_113] : memref<16x8xf32, #tpu.memory_space<vmem>>, vector<16x8xf32>
      %cst_114 = arith.constant dense<0.000000e+00> : vector<8x8xf32>
      %433 = tpu.matmul %431, %432, %cst_114 {dimension_numbers = #tpu.dot_dimension_numbers<[1], [0], [0], [1], [0, 0, 1, 1], [], []>} : vector<8x16xf32>, vector<16x8xf32>, vector<8x8xf32> -> vector<8x8xf32>
      %c0_115 = arith.constant 0 : index
      %c0_116 = arith.constant 0 : index
      %434 = vector.load %arg17[%c0_115, %c0_116] : memref<1x8xf32, #tpu.memory_space<vmem>>, vector<1x8xf32>
      %435 = vector.broadcast %434 : vector<1x8xf32> to vector<8x8xf32>
      %436 = arith.addf %433, %435 : vector<8x8xf32>
      %c0_117 = arith.constant 0 : index
      %c0_118 = arith.constant 0 : index
      %437 = vector.load %arg18[%c0_117, %c0_118] : memref<8x8xf32, #tpu.memory_space<vmem>>, vector<8x8xf32>
      tpu.vector_store %arg18[%c0_117, %c0_118], %436 {strides = array<i32>} : memref<8x8xf32, #tpu.memory_space<vmem>>, vector<8x8xf32>,
      %c0_119 = arith.constant 0 : index
      %c0_120 = arith.constant 0 : index
      %438 = vector.load %arg19[%c0_119, %c0_120] : memref<8x16xf32, #tpu.memory_space<vmem>>, vector<8x16xf32>
      tpu.vector_store %arg19[%c0_119, %c0_120], %430 {strides = array<i32>} : memref<8x16xf32, #tpu.memory_space<vmem>>, vector<8x16xf32>,
    } else {
    }
    return
  }
  func.func @transform_0(%arg0: i32) -> (i32, i32) {
    %c0_i32 = arith.constant 0 : i32
    %c0_i32_0 = arith.constant 0 : i32
    return %arg0, %c0_i32 : i32, i32
  }
  func.func @transform_1(%arg0: i32) -> (i32, i32) {
    %c0_i32 = arith.constant 0 : i32
    %c0_i32_0 = arith.constant 0 : i32
    %c0_i32_1 = arith.constant 0 : i32
    return %c0_i32, %c0_i32_0 : i32, i32
  }
  func.func @transform_2(%arg0: i32) -> (i32, i32) {
    %c0_i32 = arith.constant 0 : i32
    %c0_i32_0 = arith.constant 0 : i32
    %c0_i32_1 = arith.constant 0 : i32
    return %c0_i32, %c0_i32_0 : i32, i32
  }
  func.func @transform_3(%arg0: i32) -> (i32, i32) {
    %c0_i32 = arith.constant 0 : i32
    %c0_i32_0 = arith.constant 0 : i32
    %c0_i32_1 = arith.constant 0 : i32
    return %c0_i32, %c0_i32_0 : i32, i32
  }
  func.func @transform_4(%arg0: i32) -> (i32, i32) {
    %c0_i32 = arith.constant 0 : i32
    %c0_i32_0 = arith.constant 0 : i32
    %c0_i32_1 = arith.constant 0 : i32
    return %c0_i32, %c0_i32_0 : i32, i32
  }
  func.func @transform_5(%arg0: i32) -> (i32, i32) {
    %c0_i32 = arith.constant 0 : i32
    %c0_i32_0 = arith.constant 0 : i32
    %c0_i32_1 = arith.constant 0 : i32
    return %c0_i32, %c0_i32_0 : i32, i32
  }
  func.func @transform_6(%arg0: i32) -> (i32, i32) {
    %c0_i32 = arith.constant 0 : i32
    %c0_i32_0 = arith.constant 0 : i32
    %c0_i32_1 = arith.constant 0 : i32
    return %c0_i32, %c0_i32_0 : i32, i32
  }
  func.func @transform_7(%arg0: i32) -> (i32, i32) {
    %c0_i32 = arith.constant 0 : i32
    %c0_i32_0 = arith.constant 0 : i32
    %c0_i32_1 = arith.constant 0 : i32
    return %c0_i32, %c0_i32_0 : i32, i32
  }
  func.func @transform_8(%arg0: i32) -> (i32, i32) {
    %c0_i32 = arith.constant 0 : i32
    %c0_i32_0 = arith.constant 0 : i32
    %c0_i32_1 = arith.constant 0 : i32
    return %c0_i32, %c0_i32_0 : i32, i32
  }
  func.func @transform_9(%arg0: i32) -> (i32, i32) {
    %c0_i32 = arith.constant 0 : i32
    %c0_i32_0 = arith.constant 0 : i32
    %c0_i32_1 = arith.constant 0 : i32
    return %c0_i32, %c0_i32_0 : i32, i32
  }
  func.func @transform_10(%arg0: i32) -> (i32, i32) {
    %c0_i32 = arith.constant 0 : i32
    %c0_i32_0 = arith.constant 0 : i32
    %c0_i32_1 = arith.constant 0 : i32
    return %c0_i32, %c0_i32_0 : i32, i32
  }
  func.func @transform_11(%arg0: i32) -> (i32, i32) {
    %c0_i32 = arith.constant 0 : i32
    %c0_i32_0 = arith.constant 0 : i32
    %c0_i32_1 = arith.constant 0 : i32
    return %c0_i32, %c0_i32_0 : i32, i32
  }
  func.func @transform_12(%arg0: i32) -> (i32, i32) {
    %c0_i32 = arith.constant 0 : i32
    %c0_i32_0 = arith.constant 0 : i32
    %c0_i32_1 = arith.constant 0 : i32
    return %c0_i32, %c0_i32_0 : i32, i32
  }
  func.func @transform_13(%arg0: i32) -> (i32, i32) {
    %c0_i32 = arith.constant 0 : i32
    %c0_i32_0 = arith.constant 0 : i32
    %c0_i32_1 = arith.constant 0 : i32
    return %c0_i32, %c0_i32_0 : i32, i32
  }
  func.func @transform_14(%arg0: i32) -> (i32, i32) {
    %c0_i32 = arith.constant 0 : i32
    %c0_i32_0 = arith.constant 0 : i32
    %c0_i32_1 = arith.constant 0 : i32
    return %c0_i32, %c0_i32_0 : i32, i32
  }
  func.func @transform_15(%arg0: i32) -> (i32, i32) {
    %c0_i32 = arith.constant 0 : i32
    %c0_i32_0 = arith.constant 0 : i32
    %c0_i32_1 = arith.constant 0 : i32
    return %c0_i32, %c0_i32_0 : i32, i32
  }
  func.func @transform_16(%arg0: i32) -> (i32, i32) {
    %c0_i32 = arith.constant 0 : i32
    %c0_i32_0 = arith.constant 0 : i32
    %c0_i32_1 = arith.constant 0 : i32
    return %c0_i32, %c0_i32_0 : i32, i32
  }
  func.func @transform_17(%arg0: i32) -> (i32, i32) {
    %c0_i32 = arith.constant 0 : i32
    %c0_i32_0 = arith.constant 0 : i32
    %c0_i32_1 = arith.constant 0 : i32
    return %c0_i32, %c0_i32_0 : i32, i32
  }
  func.func @transform_18(%arg0: i32) -> (i32, i32) {
    %c0_i32 = arith.constant 0 : i32
    %c0_i32_0 = arith.constant 0 : i32
    %c0_i32_1 = arith.constant 0 : i32
    return %c0_i32, %c0_i32_0 : i32, i32
  }
}

</mosaic_0001>

<llo_original>
// kernel: cf_encoder_com_forward.1
$region0: #{cf_encoder_com_forward.1}
  #allocation0 [shape = 'u32[]', space=smem, size = 0x4, offset = 0x4, fixed_abs, tag = 'smem constant byte address 0x4 - core index']
  #allocation1 [shape = 'u32[72,128]{1,0:T(1,128)}', space=vmem, size = 0x9000, scoped, tag = 'internal scratch']
  #allocation2 [shape = 'f32[64,48]{1,0:T(8,128)}', space=vmem, size = 0x8000, scoped, tag = 'scratch operand']
  %s0 = inlined_call_operand.vmem [shape: f32[64,16], index: 0, kind: input, shape index: {}]
  %s1 = inlined_call_operand.vmem [shape: f32[8,16], index: 1, kind: input, shape index: {}]
  %s2 = inlined_call_operand.vmem [shape: bf16[16,32], index: 2, kind: input, shape index: {}]
  %s3 = inlined_call_operand.vmem [shape: f32[1,32], index: 3, kind: input, shape index: {}]
  %s4 = inlined_call_operand.vmem [shape: bf16[32,32], index: 4, kind: input, shape index: {}]
  %s5 = inlined_call_operand.vmem [shape: f32[1,32], index: 5, kind: input, shape index: {}]
  %s6 = inlined_call_operand.vmem [shape: bf16[32,16], index: 6, kind: input, shape index: {}]
  %s7 = inlined_call_operand.vmem [shape: f32[1,16], index: 7, kind: input, shape index: {}]
  %s8 = inlined_call_operand.vmem [shape: bf16[16,48], index: 8, kind: input, shape index: {}]
  %s9 = inlined_call_operand.vmem [shape: f32[1,48], index: 9, kind: input, shape index: {}]
  %s10 = inlined_call_operand.vmem [shape: f32[16,48], index: 10, kind: input, shape index: {}]
  %s11 = inlined_call_operand.vmem [shape: f32[1,48], index: 11, kind: input, shape index: {}]
  %s12 = inlined_call_operand.vmem [shape: f32[16,64], index: 12, kind: input, shape index: {}]
  %s13 = inlined_call_operand.vmem [shape: f32[16,64], index: 13, kind: input, shape index: {}]
  %s14 = inlined_call_operand.vmem [shape: f32[1,64], index: 14, kind: input, shape index: {}]
  %s15 = inlined_call_operand.vmem [shape: f32[16,8], index: 15, kind: input, shape index: {}]
  %s16 = inlined_call_operand.vmem [shape: f32[1,8], index: 16, kind: input, shape index: {}]
  %s17 = inlined_call_operand.vmem [shape: f32[8,8], index: 17, kind: output, shape index: {0}]
  %s18 = inlined_call_operand.vmem [shape: f32[8,16], index: 18, kind: output, shape index: {1}]
  %19 = xla_tuple %s17, %s18
  %s20 = sld [smem:[#allocation0]]
  $region113: #{cf_encoder_com_forward.1} parent=0
    _
  %s22 = ssub.s32 1, %s20
  %s23 = scalar_select 0, %s22, %s20
  loop: start=0, step=1, limit=10
  $region2: #{cf_encoder_com_forward.1} parent=0 // loop_pre_header
    _
  $region3: #{cf_encoder_com_forward.1} parent=0 // loop_header
    %s25 = sphi 0, %s29
    %p26 = scmp.ge.s32.totalorder %s25, 10
    %s35 = sphi 0, %s37
    %s38 = sphi 0, %s35
    %s39 = sphi 0, %s38
    %s55 = sphi 0, %s39
    %s59 = sphi 0, %s59
    %s61 = sphi 0, %s59
    %s62 = sphi 0, %s61
    %s76 = sphi 0, %s62
    %s80 = sphi 0, %s80
    %s82 = sphi 0, %s80
    %s83 = sphi 0, %s82
    %s97 = sphi 0, %s83
    %s101 = sphi 0, %s101
    %s103 = sphi 0, %s101
    %s104 = sphi 0, %s103
    %s118 = sphi 0, %s104
    %s122 = sphi 0, %s122
    %s124 = sphi 0, %s122
    %s125 = sphi 0, %s124
    %s139 = sphi 0, %s125
    %s143 = sphi 0, %s143
    %s145 = sphi 0, %s143
    %s146 = sphi 0, %s145
    %s160 = sphi 0, %s146
    %s164 = sphi 0, %s164
    %s166 = sphi 0, %s164
    %s167 = sphi 0, %s166
    %s181 = sphi 0, %s167
    %s185 = sphi 0, %s185
    %s187 = sphi 0, %s185
    %s188 = sphi 0, %s187
    %s202 = sphi 0, %s188
    %s206 = sphi 0, %s206
    %s208 = sphi 0, %s206
    %s209 = sphi 0, %s208
    %s223 = sphi 0, %s209
    %s227 = sphi 0, %s227
    %s229 = sphi 0, %s227
    %s230 = sphi 0, %s229
    %s244 = sphi 0, %s230
    %s248 = sphi 0, %s248
    %s250 = sphi 0, %s248
    %s251 = sphi 0, %s250
    %s265 = sphi 0, %s251
    %s269 = sphi 0, %s269
    %s271 = sphi 0, %s269
    %s272 = sphi 0, %s271
    %s286 = sphi 0, %s272
    %s290 = sphi 0, %s290
    %s292 = sphi 0, %s290
    %s293 = sphi 0, %s292
    %s307 = sphi 0, %s293
    %s311 = sphi 0, %s311
    %s313 = sphi 0, %s311
    %s314 = sphi 0, %s313
    %s328 = sphi 0, %s314
    %s332 = sphi 0, %s332
    %s334 = sphi 0, %s332
    %s335 = sphi 0, %s334
    %s349 = sphi 0, %s335
    %s353 = sphi 0, %s353
    %s355 = sphi 0, %s353
    %s356 = sphi 0, %s355
    %s370 = sphi 0, %s356
    %s374 = sphi 0, %s374
    %s376 = sphi 0, %s374
    %s377 = sphi 0, %s376
    %s391 = sphi 0, %s377
    %s395 = sphi 0, %s395
    %s397 = sphi 0, %s395
    %s398 = sphi 0, %s397
    %s412 = sphi 0, %s398
    %s416 = sphi 0, %s416
    %s418 = sphi 0, %s416
    %s419 = sphi 0, %s418
    %s433 = sphi 0, %s419
  $region4: #{cf_encoder_com_forward.1} parent=0 // loop_header_branch
    %28 = sbr.rel (%p26) target = $region8
  $region5: #{cf_encoder_com_forward.1} parent=0 // loop_body
    %s30 = ssub.s32 %s25, 1
    %s31 = ssub.s32 %s25, 2
    %s32 = sadd.s32 %s25, 1
    %s33 = ssub.s32 %s25, %s32
    %p34 = scmp.eq.s32.totalorder %s33, 0
    %s36 = sadd.s32 %s35, 1
    %s37 = scalar_select %p34, %s35, %s36
    %p40 = pneg %p34
    %p41 = scmp.eq.s32.totalorder %s25, 7
    %p42 = por %p40, %p41
    %p43 = scmp.ne.s32.totalorder %s35, %s38
    %p44 = scmp.eq.s32.totalorder %s25, 0
    %p45 = por %p43, %p44
    %p46 = scmp.ne.s32.totalorder %s35, %s38
    %p47 = scmp.eq.s32.totalorder %s30, 7
    %p48 = por %p46, %p47
    %p49 = scmp.ne.s32.totalorder %s38, %s39
    %p50 = scmp.eq.s32.totalorder %s30, 0
    %p51 = por %p49, %p50
    %p52 = scmp.ne.s32.totalorder %s38, %s39
    %p53 = scmp.eq.s32.totalorder %s31, 7
    %p54 = por %p52, %p53
    %p56 = scmp.ne.s32.totalorder %s39, %s55
    %p57 = scmp.eq.s32.totalorder %s31, 0
    %p58 = por %p56, %p57
    %s60 = sadd.s32 %s59, 1
    %p63 = scmp.eq.s32.totalorder %s25, 7
    %p64 = scmp.ne.s32.totalorder %s59, %s61
    %p65 = scmp.eq.s32.totalorder %s25, 0
    %p66 = por %p64, %p65
    %p67 = scmp.ne.s32.totalorder %s59, %s61
    %p68 = scmp.eq.s32.totalorder %s30, 7
    %p69 = por %p67, %p68
    %p70 = scmp.ne.s32.totalorder %s61, %s62
    %p71 = scmp.eq.s32.totalorder %s30, 0
    %p72 = por %p70, %p71
    %p73 = scmp.ne.s32.totalorder %s61, %s62
    %p74 = scmp.eq.s32.totalorder %s31, 7
    %p75 = por %p73, %p74
    %p77 = scmp.ne.s32.totalorder %s62, %s76
    %p78 = scmp.eq.s32.totalorder %s31, 0
    %p79 = por %p77, %p78
    %s81 = sadd.s32 %s80, 1
    %p84 = scmp.eq.s32.totalorder %s25, 7
    %p85 = scmp.ne.s32.totalorder %s80, %s82
    %p86 = scmp.eq.s32.totalorder %s25, 0
    %p87 = por %p85, %p86
    %p88 = scmp.ne.s32.totalorder %s80, %s82
    %p89 = scmp.eq.s32.totalorder %s30, 7
    %p90 = por %p88, %p89
    %p91 = scmp.ne.s32.totalorder %s82, %s83
    %p92 = scmp.eq.s32.totalorder %s30, 0
    %p93 = por %p91, %p92
    %p94 = scmp.ne.s32.totalorder %s82, %s83
    %p95 = scmp.eq.s32.totalorder %s31, 7
    %p96 = por %p94, %p95
    %p98 = scmp.ne.s32.totalorder %s83, %s97
    %p99 = scmp.eq.s32.totalorder %s31, 0
    %p100 = por %p98, %p99
    %s102 = sadd.s32 %s101, 1
    %p105 = scmp.eq.s32.totalorder %s25, 7
    %p106 = scmp.ne.s32.totalorder %s101, %s103
    %p107 = scmp.eq.s32.totalorder %s25, 0
    %p108 = por %p106, %p107
    %p109 = scmp.ne.s32.totalorder %s101, %s103
    %p110 = scmp.eq.s32.totalorder %s30, 7
    %p111 = por %p109, %p110
    %p112 = scmp.ne.s32.totalorder %s103, %s104
    %p113 = scmp.eq.s32.totalorder %s30, 0
    %p114 = por %p112, %p113
    %p115 = scmp.ne.s32.totalorder %s103, %s104
    %p116 = scmp.eq.s32.totalorder %s31, 7
    %p117 = por %p115, %p116
    %p119 = scmp.ne.s32.totalorder %s104, %s118
    %p120 = scmp.eq.s32.totalorder %s31, 0
    %p121 = por %p119, %p120
    %s123 = sadd.s32 %s122, 1
    %p126 = scmp.eq.s32.totalorder %s25, 7
    %p127 = scmp.ne.s32.totalorder %s122, %s124
    %p128 = scmp.eq.s32.totalorder %s25, 0
    %p129 = por %p127, %p128
    %p130 = scmp.ne.s32.totalorder %s122, %s124
    %p131 = scmp.eq.s32.totalorder %s30, 7
    %p132 = por %p130, %p131
    %p133 = scmp.ne.s32.totalorder %s124, %s125
    %p134 = scmp.eq.s32.totalorder %s30, 0
    %p135 = por %p133, %p134
    %p136 = scmp.ne.s32.totalorder %s124, %s125
    %p137 = scmp.eq.s32.totalorder %s31, 7
    %p138 = por %p136, %p137
    %p140 = scmp.ne.s32.totalorder %s125, %s139
    %p141 = scmp.eq.s32.totalorder %s31, 0
    %p142 = por %p140, %p141
    %s144 = sadd.s32 %s143, 1
    %p147 = scmp.eq.s32.totalorder %s25, 7
    %p148 = scmp.ne.s32.totalorder %s143, %s145
    %p149 = scmp.eq.s32.totalorder %s25, 0
    %p150 = por %p148, %p149
    %p151 = scmp.ne.s32.totalorder %s143, %s145
    %p152 = scmp.eq.s32.totalorder %s30, 7
    %p153 = por %p151, %p152
    %p154 = scmp.ne.s32.totalorder %s145, %s146
    %p155 = scmp.eq.s32.totalorder %s30, 0
    %p156 = por %p154, %p155
    %p157 = scmp.ne.s32.totalorder %s145, %s146
    %p158 = scmp.eq.s32.totalorder %s31, 7
    %p159 = por %p157, %p158
    %p161 = scmp.ne.s32.totalorder %s146, %s160
    %p162 = scmp.eq.s32.totalorder %s31, 0
    %p163 = por %p161, %p162
    %s165 = sadd.s32 %s164, 1
    %p168 = scmp.eq.s32.totalorder %s25, 7
    %p169 = scmp.ne.s32.totalorder %s164, %s166
    %p170 = scmp.eq.s32.totalorder %s25, 0
    %p171 = por %p169, %p170
    %p172 = scmp.ne.s32.totalorder %s164, %s166
    %p173 = scmp.eq.s32.totalorder %s30, 7
    %p174 = por %p172, %p173
    %p175 = scmp.ne.s32.totalorder %s166, %s167
    %p176 = scmp.eq.s32.totalorder %s30, 0
    %p177 = por %p175, %p176
    %p178 = scmp.ne.s32.totalorder %s166, %s167
    %p179 = scmp.eq.s32.totalorder %s31, 7
    %p180 = por %p178, %p179
    %p182 = scmp.ne.s32.totalorder %s167, %s181
    %p183 = scmp.eq.s32.totalorder %s31, 0
    %p184 = por %p182, %p183
    %s186 = sadd.s32 %s185, 1
    %p189 = scmp.eq.s32.totalorder %s25, 7
    %p190 = scmp.ne.s32.totalorder %s185, %s187
    %p191 = scmp.eq.s32.totalorder %s25, 0
    %p192 = por %p190, %p191
    %p193 = scmp.ne.s32.totalorder %s185, %s187
    %p194 = scmp.eq.s32.totalorder %s30, 7
    %p195 = por %p193, %p194
    %p196 = scmp.ne.s32.totalorder %s187, %s188
    %p197 = scmp.eq.s32.totalorder %s30, 0
    %p198 = por %p196, %p197
    %p199 = scmp.ne.s32.totalorder %s187, %s188
    %p200 = scmp.eq.s32.totalorder %s31, 7
    %p201 = por %p199, %p200
    %p203 = scmp.ne.s32.totalorder %s188, %s202
    %p204 = scmp.eq.s32.totalorder %s31, 0
    %p205 = por %p203, %p204
    %s207 = sadd.s32 %s206, 1
    %p210 = scmp.eq.s32.totalorder %s25, 7
    %p211 = scmp.ne.s32.totalorder %s206, %s208
    %p212 = scmp.eq.s32.totalorder %s25, 0
    %p213 = por %p211, %p212
    %p214 = scmp.ne.s32.totalorder %s206, %s208
    %p215 = scmp.eq.s32.totalorder %s30, 7
    %p216 = por %p214, %p215
    %p217 = scmp.ne.s32.totalorder %s208, %s209
    %p218 = scmp.eq.s32.totalorder %s30, 0
    %p219 = por %p217, %p218
    %p220 = scmp.ne.s32.totalorder %s208, %s209
    %p221 = scmp.eq.s32.totalorder %s31, 7
    %p222 = por %p220, %p221
    %p224 = scmp.ne.s32.totalorder %s209, %s223
    %p225 = scmp.eq.s32.totalorder %s31, 0
    %p226 = por %p224, %p225
    %s228 = sadd.s32 %s227, 1
    %p231 = scmp.eq.s32.totalorder %s25, 7
    %p232 = scmp.ne.s32.totalorder %s227, %s229
    %p233 = scmp.eq.s32.totalorder %s25, 0
    %p234 = por %p232, %p233
    %p235 = scmp.ne.s32.totalorder %s227, %s229
    %p236 = scmp.eq.s32.totalorder %s30, 7
    %p237 = por %p235, %p236
    %p238 = scmp.ne.s32.totalorder %s229, %s230
    %p239 = scmp.eq.s32.totalorder %s30, 0
    %p240 = por %p238, %p239
    %p241 = scmp.ne.s32.totalorder %s229, %s230
    %p242 = scmp.eq.s32.totalorder %s31, 7
    %p243 = por %p241, %p242
    %p245 = scmp.ne.s32.totalorder %s230, %s244
    %p246 = scmp.eq.s32.totalorder %s31, 0
    %p247 = por %p245, %p246
    %s249 = sadd.s32 %s248, 1
    %p252 = scmp.eq.s32.totalorder %s25, 7
    %p253 = scmp.ne.s32.totalorder %s248, %s250
    %p254 = scmp.eq.s32.totalorder %s25, 0
    %p255 = por %p253, %p254
    %p256 = scmp.ne.s32.totalorder %s248, %s250
    %p257 = scmp.eq.s32.totalorder %s30, 7
    %p258 = por %p256, %p257
    %p259 = scmp.ne.s32.totalorder %s250, %s251
    %p260 = scmp.eq.s32.totalorder %s30, 0
    %p261 = por %p259, %p260
    %p262 = scmp.ne.s32.totalorder %s250, %s251
    %p263 = scmp.eq.s32.totalorder %s31, 7
    %p264 = por %p262, %p263
    %p266 = scmp.ne.s32.totalorder %s251, %s265
    %p267 = scmp.eq.s32.totalorder %s31, 0
    %p268 = por %p266, %p267
    %s270 = sadd.s32 %s269, 1
    %p273 = scmp.eq.s32.totalorder %s25, 7
    %p274 = scmp.ne.s32.totalorder %s269, %s271
    %p275 = scmp.eq.s32.totalorder %s25, 0
    %p276 = por %p274, %p275
    %p277 = scmp.ne.s32.totalorder %s269, %s271
    %p278 = scmp.eq.s32.totalorder %s30, 7
    %p279 = por %p277, %p278
    %p280 = scmp.ne.s32.totalorder %s271, %s272
    %p281 = scmp.eq.s32.totalorder %s30, 0
    %p282 = por %p280, %p281
    %p283 = scmp.ne.s32.totalorder %s271, %s272
    %p284 = scmp.eq.s32.totalorder %s31, 7
    %p285 = por %p283, %p284
    %p287 = scmp.ne.s32.totalorder %s272, %s286
    %p288 = scmp.eq.s32.totalorder %s31, 0
    %p289 = por %p287, %p288
    %s291 = sadd.s32 %s290, 1
    %p294 = scmp.eq.s32.totalorder %s25, 7
    %p295 = scmp.ne.s32.totalorder %s290, %s292
    %p296 = scmp.eq.s32.totalorder %s25, 0
    %p297 = por %p295, %p296
    %p298 = scmp.ne.s32.totalorder %s290, %s292
    %p299 = scmp.eq.s32.totalorder %s30, 7
    %p300 = por %p298, %p299
    %p301 = scmp.ne.s32.totalorder %s292, %s293
    %p302 = scmp.eq.s32.totalorder %s30, 0
    %p303 = por %p301, %p302
    %p304 = scmp.ne.s32.totalorder %s292, %s293
    %p305 = scmp.eq.s32.totalorder %s31, 7
    %p306 = por %p304, %p305
    %p308 = scmp.ne.s32.totalorder %s293, %s307
    %p309 = scmp.eq.s32.totalorder %s31, 0
    %p310 = por %p308, %p309
    %s312 = sadd.s32 %s311, 1
    %p315 = scmp.eq.s32.totalorder %s25, 7
    %p316 = scmp.ne.s32.totalorder %s311, %s313
    %p317 = scmp.eq.s32.totalorder %s25, 0
    %p318 = por %p316, %p317
    %p319 = scmp.ne.s32.totalorder %s311, %s313
    %p320 = scmp.eq.s32.totalorder %s30, 7
    %p321 = por %p319, %p320
    %p322 = scmp.ne.s32.totalorder %s313, %s314
    %p323 = scmp.eq.s32.totalorder %s30, 0
    %p324 = por %p322, %p323
    %p325 = scmp.ne.s32.totalorder %s313, %s314
    %p326 = scmp.eq.s32.totalorder %s31, 7
    %p327 = por %p325, %p326
    %p329 = scmp.ne.s32.totalorder %s314, %s328
    %p330 = scmp.eq.s32.totalorder %s31, 0
    %p331 = por %p329, %p330
    %s333 = sadd.s32 %s332, 1
    %p336 = scmp.eq.s32.totalorder %s25, 7
    %p337 = scmp.ne.s32.totalorder %s332, %s334
    %p338 = scmp.eq.s32.totalorder %s25, 0
    %p339 = por %p337, %p338
    %p340 = scmp.ne.s32.totalorder %s332, %s334
    %p341 = scmp.eq.s32.totalorder %s30, 7
    %p342 = por %p340, %p341
    %p343 = scmp.ne.s32.totalorder %s334, %s335
    %p344 = scmp.eq.s32.totalorder %s30, 0
    %p345 = por %p343, %p344
    %p346 = scmp.ne.s32.totalorder %s334, %s335
    %p347 = scmp.eq.s32.totalorder %s31, 7
    %p348 = por %p346, %p347
    %p350 = scmp.ne.s32.totalorder %s335, %s349
    %p351 = scmp.eq.s32.totalorder %s31, 0
    %p352 = por %p350, %p351
    %s354 = sadd.s32 %s353, 1
    %p357 = scmp.eq.s32.totalorder %s25, 7
    %p358 = scmp.ne.s32.totalorder %s353, %s355
    %p359 = scmp.eq.s32.totalorder %s25, 0
    %p360 = por %p358, %p359
    %p361 = scmp.ne.s32.totalorder %s353, %s355
    %p362 = scmp.eq.s32.totalorder %s30, 7
    %p363 = por %p361, %p362
    %p364 = scmp.ne.s32.totalorder %s355, %s356
    %p365 = scmp.eq.s32.totalorder %s30, 0
    %p366 = por %p364, %p365
    %p367 = scmp.ne.s32.totalorder %s355, %s356
    %p368 = scmp.eq.s32.totalorder %s31, 7
    %p369 = por %p367, %p368
    %p371 = scmp.ne.s32.totalorder %s356, %s370
    %p372 = scmp.eq.s32.totalorder %s31, 0
    %p373 = por %p371, %p372
    %s375 = sadd.s32 %s374, 1
    %p378 = scmp.eq.s32.totalorder %s25, 7
    %p379 = scmp.ne.s32.totalorder %s374, %s376
    %p380 = scmp.eq.s32.totalorder %s25, 0
    %p381 = por %p379, %p380
    %p382 = scmp.ne.s32.totalorder %s374, %s376
    %p383 = scmp.eq.s32.totalorder %s30, 7
    %p384 = por %p382, %p383
    %p385 = scmp.ne.s32.totalorder %s376, %s377
    %p386 = scmp.eq.s32.totalorder %s30, 0
    %p387 = por %p385, %p386
    %p388 = scmp.ne.s32.totalorder %s376, %s377
    %p389 = scmp.eq.s32.totalorder %s31, 7
    %p390 = por %p388, %p389
    %p392 = scmp.ne.s32.totalorder %s377, %s391
    %p393 = scmp.eq.s32.totalorder %s31, 0
    %p394 = por %p392, %p393
    %s396 = sadd.s32 %s395, 1
    %p399 = scmp.eq.s32.totalorder %s25, 7
    %p400 = scmp.ne.s32.totalorder %s395, %s397
    %p401 = scmp.eq.s32.totalorder %s25, 0
    %p402 = por %p400, %p401
    %p403 = scmp.ne.s32.totalorder %s395, %s397
    %p404 = scmp.eq.s32.totalorder %s30, 7
    %p405 = por %p403, %p404
    %p406 = scmp.ne.s32.totalorder %s397, %s398
    %p407 = scmp.eq.s32.totalorder %s30, 0
    %p408 = por %p406, %p407
    %p409 = scmp.ne.s32.totalorder %s397, %s398
    %p410 = scmp.eq.s32.totalorder %s31, 7
    %p411 = por %p409, %p410
    %p413 = scmp.ne.s32.totalorder %s398, %s412
    %p414 = scmp.eq.s32.totalorder %s31, 0
    %p415 = por %p413, %p414
    %s417 = sadd.s32 %s416, 1
    %p420 = scmp.eq.s32.totalorder %s25, 7
    %p421 = scmp.ne.s32.totalorder %s416, %s418
    %p422 = scmp.eq.s32.totalorder %s25, 0
    %p423 = por %p421, %p422
    %p424 = scmp.ne.s32.totalorder %s416, %s418
    %p425 = scmp.eq.s32.totalorder %s30, 7
    %p426 = por %p424, %p425
    %p427 = scmp.ne.s32.totalorder %s418, %s419
    %p428 = scmp.eq.s32.totalorder %s30, 0
    %p429 = por %p427, %p428
    %p430 = scmp.ne.s32.totalorder %s418, %s419
    %p431 = scmp.eq.s32.totalorder %s31, 7
    %p432 = por %p430, %p431
    %p434 = scmp.ne.s32.totalorder %s419, %s433
    %p435 = scmp.eq.s32.totalorder %s31, 0
    %p436 = por %p434, %p435
    %p437 = scmp.le.s32.totalorder 1, %s25
    %p438 = scmp.lt.s32.totalorder %s25, 9
    %p439 = pnand %p437, %p438
    %p440 = pneg %p439
    // Predicated region
    $region9: #{cf_encoder_com_forward.1} parent=5 // pred_check
      _
    $region10: #{cf_encoder_com_forward.1} parent=5 // pred_check_branch
      %442 = sbr.rel (%p439) target = $region12
    $region11: #{cf_encoder_com_forward.1} parent=5 // pred_region
      %s443 = ssub.s32 %s25, 1
      // Predicated region
      $region13: #{cf_encoder_com_forward.1} parent=11 // pred_check
        %p444 = pneg %p72
      $region14: #{cf_encoder_com_forward.1} parent=11 // pred_check_branch
        %446 = sbr.rel (%p444) target = $region16
      $region15: #{cf_encoder_com_forward.1} parent=11 // pred_region
        _
      $region16: #{cf_encoder_com_forward.1} parent=11 // pred_fallthru
        _
      // Predicated region
      $region17: #{cf_encoder_com_forward.1} parent=11 // pred_check
        %p447 = pneg %p93
      $region18: #{cf_encoder_com_forward.1} parent=11 // pred_check_branch
        %449 = sbr.rel (%p447) target = $region20
      $region19: #{cf_encoder_com_forward.1} parent=11 // pred_region
        _
      $region20: #{cf_encoder_com_forward.1} parent=11 // pred_fallthru
        _
      // Predicated region
      $region21: #{cf_encoder_com_forward.1} parent=11 // pred_check
        %p450 = pneg %p114
      $region22: #{cf_encoder_com_forward.1} parent=11 // pred_check_branch
        %452 = sbr.rel (%p450) target = $region24
      $region23: #{cf_encoder_com_forward.1} parent=11 // pred_region
        _
      $region24: #{cf_encoder_com_forward.1} parent=11 // pred_fallthru
        _
      // Predicated region
      $region25: #{cf_encoder_com_forward.1} parent=11 // pred_check
        %p453 = pneg %p135
      $region26: #{cf_encoder_com_forward.1} parent=11 // pred_check_branch
        %455 = sbr.rel (%p453) target = $region28
      $region27: #{cf_encoder_com_forward.1} parent=11 // pred_region
        _
      $region28: #{cf_encoder_com_forward.1} parent=11 // pred_fallthru
        _
      // Predicated region
      $region29: #{cf_encoder_com_forward.1} parent=11 // pred_check
        %p456 = pneg %p156
      $region30: #{cf_encoder_com_forward.1} parent=11 // pred_check_branch
        %458 = sbr.rel (%p456) target = $region32
      $region31: #{cf_encoder_com_forward.1} parent=11 // pred_region
        _
      $region32: #{cf_encoder_com_forward.1} parent=11 // pred_fallthru
        _
      // Predicated region
      $region33: #{cf_encoder_com_forward.1} parent=11 // pred_check
        %p459 = pneg %p177
      $region34: #{cf_encoder_com_forward.1} parent=11 // pred_check_branch
        %461 = sbr.rel (%p459) target = $region36
      $region35: #{cf_encoder_com_forward.1} parent=11 // pred_region
        _
      $region36: #{cf_encoder_com_forward.1} parent=11 // pred_fallthru
        _
      // Predicated region
      $region37: #{cf_encoder_com_forward.1} parent=11 // pred_check
        %p462 = pneg %p198
      $region38: #{cf_encoder_com_forward.1} parent=11 // pred_check_branch
        %464 = sbr.rel (%p462) target = $region40
      $region39: #{cf_encoder_com_forward.1} parent=11 // pred_region
        _
      $region40: #{cf_encoder_com_forward.1} parent=11 // pred_fallthru
        _
      // Predicated region
      $region41: #{cf_encoder_com_forward.1} parent=11 // pred_check
        %p465 = pneg %p219
      $region42: #{cf_encoder_com_forward.1} parent=11 // pred_check_branch
        %467 = sbr.rel (%p465) target = $region44
      $region43: #{cf_encoder_com_forward.1} parent=11 // pred_region
        _
      $region44: #{cf_encoder_com_forward.1} parent=11 // pred_fallthru
        _
      // Predicated region
      $region45: #{cf_encoder_com_forward.1} parent=11 // pred_check
        %p468 = pneg %p240
      $region46: #{cf_encoder_com_forward.1} parent=11 // pred_check_branch
        %470 = sbr.rel (%p468) target = $region48
      $region47: #{cf_encoder_com_forward.1} parent=11 // pred_region
        _
      $region48: #{cf_encoder_com_forward.1} parent=11 // pred_fallthru
        _
      // Predicated region
      $region49: #{cf_encoder_com_forward.1} parent=11 // pred_check
        %p471 = pneg %p261
      $region50: #{cf_encoder_com_forward.1} parent=11 // pred_check_branch
        %473 = sbr.rel (%p471) target = $region52
      $region51: #{cf_encoder_com_forward.1} parent=11 // pred_region
        _
      $region52: #{cf_encoder_com_forward.1} parent=11 // pred_fallthru
        _
      // Predicated region
      $region53: #{cf_encoder_com_forward.1} parent=11 // pred_check
        %p474 = pneg %p282
      $region54: #{cf_encoder_com_forward.1} parent=11 // pred_check_branch
        %476 = sbr.rel (%p474) target = $region56
      $region55: #{cf_encoder_com_forward.1} parent=11 // pred_region
        _
      $region56: #{cf_encoder_com_forward.1} parent=11 // pred_fallthru
        _
      // Predicated region
      $region57: #{cf_encoder_com_forward.1} parent=11 // pred_check
        %p477 = pneg %p303
      $region58: #{cf_encoder_com_forward.1} parent=11 // pred_check_branch
        %479 = sbr.rel (%p477) target = $region60
      $region59: #{cf_encoder_com_forward.1} parent=11 // pred_region
        _
      $region60: #{cf_encoder_com_forward.1} parent=11 // pred_fallthru
        _
      // Predicated region
      $region61: #{cf_encoder_com_forward.1} parent=11 // pred_check
        %p480 = pneg %p324
      $region62: #{cf_encoder_com_forward.1} parent=11 // pred_check_branch
        %482 = sbr.rel (%p480) target = $region64
      $region63: #{cf_encoder_com_forward.1} parent=11 // pred_region
        _
      $region64: #{cf_encoder_com_forward.1} parent=11 // pred_fallthru
        _
      // Predicated region
      $region65: #{cf_encoder_com_forward.1} parent=11 // pred_check
        %p483 = pneg %p345
      $region66: #{cf_encoder_com_forward.1} parent=11 // pred_check_branch
        %485 = sbr.rel (%p483) target = $region68
      $region67: #{cf_encoder_com_forward.1} parent=11 // pred_region
        _
      $region68: #{cf_encoder_com_forward.1} parent=11 // pred_fallthru
        _
      // Predicated region
      $region69: #{cf_encoder_com_forward.1} parent=11 // pred_check
        %p486 = pneg %p366
      $region70: #{cf_encoder_com_forward.1} parent=11 // pred_check_branch
        %488 = sbr.rel (%p486) target = $region72
      $region71: #{cf_encoder_com_forward.1} parent=11 // pred_region
        _
      $region72: #{cf_encoder_com_forward.1} parent=11 // pred_fallthru
        _
      // Predicated region
      $region73: #{cf_encoder_com_forward.1} parent=11 // pred_check
        %p489 = pneg %p387
      $region74: #{cf_encoder_com_forward.1} parent=11 // pred_check_branch
        %491 = sbr.rel (%p489) target = $region76
      $region75: #{cf_encoder_com_forward.1} parent=11 // pred_region
        _
      $region76: #{cf_encoder_com_forward.1} parent=11 // pred_fallthru
        _
    $region12: #{cf_encoder_com_forward.1} parent=5 // pred_fallthru
      _
    %p492 = scmp.lt.s32.totalorder %s25, 8
    // Predicated region
    $region77: #{cf_encoder_com_forward.1} parent=5 // pred_check
      %p493 = pneg %p492
    $region78: #{cf_encoder_com_forward.1} parent=5 // pred_check_branch
      %495 = sbr.rel (%p493) target = $region80
    $region79: #{cf_encoder_com_forward.1} parent=5 // pred_region
      // Predicated region
      $region81: #{cf_encoder_com_forward.1} parent=79 // pred_check
        %p496 = pneg %p45
      $region82: #{cf_encoder_com_forward.1} parent=79 // pred_check_branch
        %498 = sbr.rel (%p496) target = $region84
      $region83: #{cf_encoder_com_forward.1} parent=79 // pred_region
        %p499 = scmp.lt.s32.totalorder %s25, 7
        %s500 = scalar_select %p499, %s25, 7
        %s501 = smul.addr %s500, 8
        %s502 = scalar_lea.vmem %s0, %s501
      $region84: #{cf_encoder_com_forward.1} parent=79 // pred_fallthru
        _
    $region80: #{cf_encoder_com_forward.1} parent=5 // pred_fallthru
      _
    %p503 = scmp.le.s32.totalorder 1, %s25
    %p504 = scmp.lt.s32.totalorder %s25, 9
    %p505 = pnand %p503, %p504
    %p506 = pneg %p505
    // Predicated region
    $region85: #{cf_encoder_com_forward.1} parent=5 // pred_check
      _
    $region86: #{cf_encoder_com_forward.1} parent=5 // pred_check_branch
      %508 = sbr.rel (%p505) target = $region88
    $region87: #{cf_encoder_com_forward.1} parent=5 // pred_region
      %s509 = ssub.s32 %s25, 1
      %p510 = scmp.lt.s32.totalorder %s30, 7
      %s511 = scalar_select %p510, %s30, 7
      %s512 = smul.addr %s511, 8
      %s513 = scalar_lea.vmem %s0, %s512
      %p514 = pneg %p51
      %p515 = pneg %p48
      %p516 = pneg %p72
      %p517 = pneg %p69
      %p518 = pneg %p93
      %p519 = pneg %p90
      %p520 = pneg %p114
      %p521 = pneg %p111
      %p522 = pneg %p135
      %p523 = pneg %p132
      %p524 = pneg %p156
      %p525 = pneg %p153
      %p526 = pneg %p177
      %p527 = pneg %p174
      %p528 = pneg %p198
      %p529 = pneg %p195
      %p530 = pneg %p219
      %p531 = pneg %p216
      %p532 = pneg %p240
      %p533 = pneg %p237
      %p534 = pneg %p261
      %p535 = pneg %p258
      %p536 = pneg %p282
      %p537 = pneg %p279
      %p538 = pneg %p303
      %p539 = pneg %p300
      %p540 = pneg %p324
      %p541 = pneg %p321
      %p542 = pneg %p345
      %p543 = pneg %p342
      %p544 = pneg %p366
      %p545 = pneg %p363
      %p546 = pneg %p387
      %p547 = pneg %p384
      %p548 = pneg %p408
      %p549 = pneg %p405
      %p550 = pneg %p429
      %p551 = pneg %p426
      %p552 = scmp.lt.s32.totalorder %s30, 7
      %s553 = scalar_select %p552, %s30, 7
      %s554 = smul.addr %s553, 8
      %s555 = scalar_lea.vmem %s0, %s554
      %v557 = vld [vmem:[%s555] sm:$0xff]
      %v558 = vpack.c.bf16 %v557, %v557
      %v559 = vld [vmem:[%s2] sm:$0xf]
      %v560 = vld [vmem:[%s2 + $0x4] sm:$0xf]
      %v561 = vld [vmem:[%s3] sm:$0x1]
      %v563 = vperm.slane %v561, 0
      %v567 = vunpack.c.l.b16 %v559
      %v568 = vunpack.c.l.b16 %v560
      %v569 = vpack.c.b16 %v568, %v567
      %vm571 = vcmask 130048
      %v573 = vsel %vm571, %v558, 0
      %575 = vmatpush.bf16.msra.mxu0 0
      %576 = vmatpush.bf16.msra.mxu0 0
      %577 = vmatpush.bf16.msra.mxu0 0
      %578 = vmatpush.bf16.msra.mxu0 0
      %579 = vmatpush.bf16.msra.mxu0 0
      %580 = vmatpush.bf16.msra.mxu0 0
      %581 = vmatpush.bf16.msra.mxu0 0
      %582 = vmatpush.bf16.msra.mxu0 %v569
      %583 = vmatmul.bf16.gmra.mxu0 %v573
      %v584 = vpop.f32.mrf.mxu0
      %v585 = vadd.f32 %v563, %v584
      %v586 = vpop.f32.mrf.mxu0
      %587 = vdwg.mxu0
      %v588 = vmax.f32 %v585, 0.0
      %v589 = vpack.c.bf16 %v588, %v588
      %v590 = vld [vmem:[%s4] sm:$0xf]
      %v591 = vld [vmem:[%s4 + $0x4] sm:$0xf]
      %v592 = vld [vmem:[%s4 + $0x8] sm:$0xf]
      %v593 = vld [vmem:[%s4 + $0xc] sm:$0xf]
      %v594 = vld [vmem:[%s5] sm:$0x1]
      %v596 = vperm.slane %v594, 0
      %v602 = vunpack.c.l.b16 %v590
      %v603 = vunpack.c.l.b16 %v591
      %v604 = vunpack.c.l.b16 %v592
      %v605 = vunpack.c.l.b16 %v593
      %v606 = vpack.c.b16 %v603, %v602
      %v607 = vpack.c.b16 %v605, %v604
      %vm610 = vcmask 261120
      %v612 = vsel %vm610, %v589, 0
      %614 = vmatpush.bf16.msra.mxu0 0
      %615 = vmatpush.bf16.msra.mxu0 0
      %616 = vmatpush.bf16.msra.mxu0 0
      %617 = vmatpush.bf16.msra.mxu0 0
      %618 = vmatpush.bf16.msra.mxu0 0
      %619 = vmatpush.bf16.msra.mxu0 0
      %620 = vmatpush.bf16.msra.mxu0 %v607
      %621 = vmatpush.bf16.msra.mxu0 %v606
      %622 = vmatmul.bf16.gmra.mxu0 %v612
      %v623 = vpop.f32.mrf.mxu0
      %v624 = vadd.f32 %v596, %v623
      %v625 = vpop.f32.mrf.mxu0
      %626 = vdwg.mxu0
      %v627 = vmax.f32 %v624, 0.0
      %v628 = vpack.c.bf16 %v627, %v627
      %v629 = vld [vmem:[%s6] sm:$0xf]
      %v630 = vld [vmem:[%s6 + $0x4] sm:$0xf]
      %v631 = vld [vmem:[%s6 + $0x8] sm:$0xf]
      %v632 = vld [vmem:[%s6 + $0xc] sm:$0xf]
      %v633 = vld [vmem:[%s7] sm:$0x1]
      %v635 = vperm.slane %v633, 0
      %v641 = vunpack.c.l.b16 %v629
      %v642 = vunpack.c.l.b16 %v630
      %v643 = vunpack.c.l.b16 %v631
      %v644 = vunpack.c.l.b16 %v632
      %v645 = vpack.c.b16 %v642, %v641
      %v646 = vpack.c.b16 %v644, %v643
      %v650 = vsel %vm610, %v628, 0
      %652 = vmatpush.bf16.msra.mxu0 0
      %653 = vmatpush.bf16.msra.mxu0 0
      %654 = vmatpush.bf16.msra.mxu0 0
      %655 = vmatpush.bf16.msra.mxu0 0
      %656 = vmatpush.bf16.msra.mxu0 0
      %657 = vmatpush.bf16.msra.mxu0 0
      %658 = vmatpush.bf16.msra.mxu0 %v646
      %659 = vmatpush.bf16.msra.mxu0 %v645
      %660 = vmatmul.bf16.gmra.mxu0 %v650
      %v661 = vpop.f32.mrf.mxu0
      %v662 = vadd.f32 %v635, %v661
      %v663 = vpop.f32.mrf.mxu0
      %664 = vdwg.mxu0
      %v665 = vpack.c.bf16 %v662, %v662
      %v666 = vld [vmem:[%s8] sm:$0xf]
      %v667 = vld [vmem:[%s8 + $0x4] sm:$0xf]
      %v668 = vld [vmem:[%s9] sm:$0x1]
      %v670 = vperm.slane %v668, 0
      %v674 = vunpack.c.l.b16 %v666
      %v675 = vunpack.c.l.b16 %v667
      %v676 = vpack.c.b16 %v675, %v674
      %v679 = vsel %vm571, %v665, 0
      %681 = vmatpush.bf16.msra.mxu0 0
      %682 = vmatpush.bf16.msra.mxu0 0
      %683 = vmatpush.bf16.msra.mxu0 0
      %684 = vmatpush.bf16.msra.mxu0 0
      %685 = vmatpush.bf16.msra.mxu0 0
      %686 = vmatpush.bf16.msra.mxu0 0
      %687 = vmatpush.bf16.msra.mxu0 0
      %688 = vmatpush.bf16.msra.mxu0 %v676
      %689 = vmatmul.bf16.gmra.mxu0 %v679
      %v690 = vpop.f32.mrf.mxu0
      %v691 = vadd.f32 %v670, %v690
      %v692 = vpop.f32.mrf.mxu0
      %693 = vdwg.mxu0
      %s694 = smul.u32 %s30, 8
      %s695 = scalar_lea.vmem [#allocation2], %s694
      %vm696 = vcmask 392192
      %697 = vst.msk [vmem:[%s695] sm:$0xff] %vm696, %v691
      %p698 = scmp.eq.s32.totalorder %s30, 7
      // Predicated region
      $region89: #{cf_encoder_com_forward.1} parent=87 // pred_check
        %p699 = pneg %p698
      $region90: #{cf_encoder_com_forward.1} parent=87 // pred_check_branch
        %701 = sbr.rel (%p699) target = $region92
      $region91: #{cf_encoder_com_forward.1} parent=87 // pred_region
        %v702 = vld [vmem:[%s10] sm:$0xff]
        %v703 = vld [vmem:[%s10 + $0x8] sm:$0xff]
        %v704 = vld [vmem:[%s12] sm:$0xff]
        %v705 = vld [vmem:[%s12 + $0x8] sm:$0xff]
        %v706 = vld [vmem:[%s13] sm:$0xff]
        %v707 = vld [vmem:[%s13 + $0x8] sm:$0xff]
        %v708 = vld [vmem:[%s11] sm:$0x1]
        %v710 = vperm.slane %v708, 0
        %v712 = vld [vmem:[%s14] sm:$0x1]
        %v714 = vperm.slane %v712, 0
        %v716 = vld [vmem:[#allocation2] sm:$0xff]
        %v718 = vsel %vm571, 0.0, 0
        %720 = vmatpush.msra.mxu0 0.0
        %721 = vmatpush.msra.mxu0 0.0
        %722 = vmatpush.msra.mxu0 0.0
        %723 = vmatpush.msra.mxu0 0.0
        %724 = vmatpush.msra.mxu0 0.0
        %725 = vmatpush.msra.mxu0 0.0
        %726 = vmatpush.msra.mxu0 0.0
        %727 = vmatpush.msra.mxu0 0.0
        %728 = vmatpush.msra.mxu0 0.0
        %729 = vmatpush.msra.mxu0 0.0
        %730 = vmatpush.msra.mxu0 0.0
        %731 = vmatpush.msra.mxu0 0.0
        %732 = vmatpush.msra.mxu0 0.0
        %733 = vmatpush.msra.mxu0 0.0
        %734 = vmatpush.msra.mxu0 %v703
        %735 = vmatpush.msra.mxu0 %v702
        %736 = vmatmul.f32.gmra.mxu0 %v718
        %v737 = vpop.f32.mrf.mxu0
        %v738 = vadd.f32 %v710, %v737
        %739 = vdwg.mxu0
        %v740 = vadd.f32 %v716, %v738
        %v741 = vxor.u32 %v740, 2147483648
        %v742 = vmul.f32 %v741, 1.442695
        %v743 = vpow.pop %v742
        %v744 = vadd.f32 %v743, 1.0
        %v745 = vrcp.pop %v744
        %v746 = vmul.f32 %v744, %v745
        %v747 = vsub.f32 1.0, %v746
        %v748 = vmul.f32 %v745, %v747
        %v749 = vadd.f32 %v745, %v748
        %vm750 = vweird.f32 %v744
        %vm751 = vweird.f32 %v745
        %vm752 = vmor %vm750, %vm751
        %v753 = vsel %vm752, %v745, %v749
        %v754 = vand.u32 2147483647, %v744
        %vm755 = vcmp.eq.f32.partialorder %v754, 8.507059e+37
        %v756 = vand.u32 %v744, 2147483648
        %v757 = vor.u32 1.1754944e-38, %v756
        %v758 = vsel %vm755, %v757, %v753
        %v759 = vmul.f32 1.0, %v758
        %761 = vrot.lane.b32.xlu0 %v738, 96
        %v762 = vpop.permute.xlu0 %761
        %v764 = vmul.f32 %v759, %v762
        %766 = vrot.lane.b32.xlu0 %v764, 32
        %v767 = vpop.permute.xlu0 %766
        %v769 = vadd.f32 %v716, %v767
        %v770 = vtanh.pop %v769
        %v771 = vsub.f32 1.0, %v759
        %773 = vrot.lane.b32.xlu0 %v770, 112
        %v774 = vpop.permute.xlu0 %773
        %v776 = vmul.f32 %v771, %v774
        %v777 = vmul.f32 %v759, 0.0
        %v778 = vadd.f32 %v776, %v777
        %779 = vmatpush.msra.mxu0 0.0
        %780 = vmatpush.msra.mxu0 0.0
        %781 = vmatpush.msra.mxu0 0.0
        %782 = vmatpush.msra.mxu0 0.0
        %783 = vmatpush.msra.mxu0 0.0
        %784 = vmatpush.msra.mxu0 0.0
        %785 = vmatpush.msra.mxu0 0.0
        %786 = vmatpush.msra.mxu0 0.0
        %787 = vmatpush.msra.mxu0 0.0
        %788 = vmatpush.msra.mxu0 0.0
        %789 = vmatpush.msra.mxu0 0.0
        %790 = vmatpush.msra.mxu0 0.0
        %791 = vmatpush.msra.mxu0 0.0
        %792 = vmatpush.msra.mxu0 0.0
        %793 = vmatpush.msra.mxu0 %v707
        %794 = vmatpush.msra.mxu0 %v706
        %795 = vmatmul.f32.gmra.mxu0 %v718
        %v796 = vpop.f32.mrf.mxu0
        %v797 = vadd.f32 0.0, %v796
        %798 = vdwg.mxu0
        %800 = vrot.lane.b32.xlu0 %v778, 112
        %v801 = vpop.permute.xlu0 %800
        %v802 = vsel %vm571, %v801, 0
        %804 = vmatpush.msra.mxu0 0.0
        %805 = vmatpush.msra.mxu0 0.0
        %806 = vmatpush.msra.mxu0 0.0
        %807 = vmatpush.msra.mxu0 0.0
        %808 = vmatpush.msra.mxu0 0.0
        %809 = vmatpush.msra.mxu0 0.0
        %810 = vmatpush.msra.mxu0 0.0
        %811 = vmatpush.msra.mxu0 0.0
        %812 = vmatpush.msra.mxu0 0.0
        %813 = vmatpush.msra.mxu0 0.0
        %814 = vmatpush.msra.mxu0 0.0
        %815 = vmatpush.msra.mxu0 0.0
        %816 = vmatpush.msra.mxu0 0.0
        %817 = vmatpush.msra.mxu0 0.0
        %818 = vmatpush.msra.mxu0 %v705
        %819 = vmatpush.msra.mxu0 %v704
        %820 = vmatmul.f32.gmra.mxu0 %v802
        %v821 = vpop.f32.mrf.mxu0
        %v822 = vadd.f32 %v797, %v821
        %823 = vdwg.mxu0
        %v824 = vadd.f32 %v822, %v714
        %v825 = vxor.u32 %v824, 2147483648
        %v826 = vmul.f32 %v825, 1.442695
        %v827 = vpow.pop %v826
        %v828 = vadd.f32 %v827, 1.0
        %v829 = vrcp.pop %v828
        %v830 = vmul.f32 %v828, %v829
        %v831 = vsub.f32 1.0, %v830
        %v832 = vmul.f32 %v829, %v831
        %v833 = vadd.f32 %v829, %v832
        %vm834 = vweird.f32 %v828
        %vm835 = vweird.f32 %v829
        %vm836 = vmor %vm834, %vm835
        %v837 = vsel %vm836, %v829, %v833
        %v838 = vand.u32 2147483647, %v828
        %vm839 = vcmp.eq.f32.partialorder %v838, 8.507059e+37
        %v840 = vand.u32 %v828, 2147483648
        %v841 = vor.u32 1.1754944e-38, %v840
        %v842 = vsel %vm839, %v841, %v837
        %v843 = vmul.f32 1.0, %v842
        %845 = vrot.lane.b32.xlu0 %v824, 80
        %v846 = vpop.permute.xlu0 %845
        %v848 = vmul.f32 %v843, %v846
        %850 = vrot.lane.b32.xlu0 %v848, 32
        %v851 = vpop.permute.xlu0 %850
        %v853 = vadd.f32 %v824, %v851
        %v854 = vtanh.pop %v853
        %v855 = vsub.f32 1.0, %v843
        %857 = vrot.lane.b32.xlu0 %v854, 112
        %v858 = vpop.permute.xlu0 %857
        %v860 = vmul.f32 %v855, %v858
        %v861 = vmul.f32 %v843, 0.0
        %v862 = vadd.f32 %v860, %v861
        %s863 = scalar_lea.vmem [#allocation2], 8
        %v864 = vld [vmem:[%s863] sm:$0xff]
        %865 = vmatpush.msra.mxu0 0.0
        %866 = vmatpush.msra.mxu0 0.0
        %867 = vmatpush.msra.mxu0 0.0
        %868 = vmatpush.msra.mxu0 0.0
        %869 = vmatpush.msra.mxu0 0.0
        %870 = vmatpush.msra.mxu0 0.0
        %871 = vmatpush.msra.mxu0 0.0
        %872 = vmatpush.msra.mxu0 0.0
        %873 = vmatpush.msra.mxu0 0.0
        %874 = vmatpush.msra.mxu0 0.0
        %875 = vmatpush.msra.mxu0 0.0
        %876 = vmatpush.msra.mxu0 0.0
        %877 = vmatpush.msra.mxu0 0.0
        %878 = vmatpush.msra.mxu0 0.0
        %879 = vmatpush.msra.mxu0 %v703
        %880 = vmatpush.msra.mxu0 %v702
        %881 = vmatmul.f32.gmra.mxu0 %v802
        %v882 = vpop.f32.mrf.mxu0
        %v883 = vadd.f32 %v710, %v882
        %884 = vdwg.mxu0
        %v885 = vadd.f32 %v864, %v883
        %v886 = vxor.u32 %v885, 2147483648
        %v887 = vmul.f32 %v886, 1.442695
        %v888 = vpow.pop %v887
        %v889 = vadd.f32 %v888, 1.0
        %v890 = vrcp.pop %v889
        %v891 = vmul.f32 %v889, %v890
        %v892 = vsub.f32 1.0, %v891
        %v893 = vmul.f32 %v890, %v892
        %v894 = vadd.f32 %v890, %v893
        %vm895 = vweird.f32 %v889
        %vm896 = vweird.f32 %v890
        %vm897 = vmor %vm895, %vm896
        %v898 = vsel %vm897, %v890, %v894
        %v899 = vand.u32 2147483647, %v889
        %vm900 = vcmp.eq.f32.partialorder %v899, 8.507059e+37
        %v901 = vand.u32 %v889, 2147483648
        %v902 = vor.u32 1.1754944e-38, %v901
        %v903 = vsel %vm900, %v902, %v898
        %v904 = vmul.f32 1.0, %v903
        %906 = vrot.lane.b32.xlu0 %v883, 96
        %v907 = vpop.permute.xlu0 %906
        %v909 = vmul.f32 %v904, %v907
        %911 = vrot.lane.b32.xlu0 %v909, 32
        %v912 = vpop.permute.xlu0 %911
        %v914 = vadd.f32 %v864, %v912
        %v915 = vtanh.pop %v914
        %v916 = vsub.f32 1.0, %v904
        %918 = vrot.lane.b32.xlu0 %v915, 112
        %v919 = vpop.permute.xlu0 %918
        %v921 = vmul.f32 %v916, %v919
        %v922 = vmul.f32 %v904, %v778
        %v923 = vadd.f32 %v921, %v922
        %925 = vrot.lane.b32.xlu0 %v862, 112
        %v926 = vpop.permute.xlu0 %925
        %v927 = vsel %vm571, %v926, 0
        %929 = vmatpush.msra.mxu0 0.0
        %930 = vmatpush.msra.mxu0 0.0
        %931 = vmatpush.msra.mxu0 0.0
        %932 = vmatpush.msra.mxu0 0.0
        %933 = vmatpush.msra.mxu0 0.0
        %934 = vmatpush.msra.mxu0 0.0
        %935 = vmatpush.msra.mxu0 0.0
        %936 = vmatpush.msra.mxu0 0.0
        %937 = vmatpush.msra.mxu0 0.0
        %938 = vmatpush.msra.mxu0 0.0
        %939 = vmatpush.msra.mxu0 0.0
        %940 = vmatpush.msra.mxu0 0.0
        %941 = vmatpush.msra.mxu0 0.0
        %942 = vmatpush.msra.mxu0 0.0
        %943 = vmatpush.msra.mxu0 %v707
        %944 = vmatpush.msra.mxu0 %v706
        %945 = vmatmul.f32.gmra.mxu0 %v927
        %v946 = vpop.f32.mrf.mxu0
        %v947 = vadd.f32 0.0, %v946
        %948 = vdwg.mxu0
        %950 = vrot.lane.b32.xlu0 %v923, 112
        %v951 = vpop.permute.xlu0 %950
        %v952 = vsel %vm571, %v951, 0
        %954 = vmatpush.msra.mxu0 0.0
        %955 = vmatpush.msra.mxu0 0.0
        %956 = vmatpush.msra.mxu0 0.0
        %957 = vmatpush.msra.mxu0 0.0
        %958 = vmatpush.msra.mxu0 0.0
        %959 = vmatpush.msra.mxu0 0.0
        %960 = vmatpush.msra.mxu0 0.0
        %961 = vmatpush.msra.mxu0 0.0
        %962 = vmatpush.msra.mxu0 0.0
        %963 = vmatpush.msra.mxu0 0.0
        %964 = vmatpush.msra.mxu0 0.0
        %965 = vmatpush.msra.mxu0 0.0
        %966 = vmatpush.msra.mxu0 0.0
        %967 = vmatpush.msra.mxu0 0.0
        %968 = vmatpush.msra.mxu0 %v705
        %969 = vmatpush.msra.mxu0 %v704
        %970 = vmatmul.f32.gmra.mxu0 %v952
        %v971 = vpop.f32.mrf.mxu0
        %v972 = vadd.f32 %v947, %v971
        %973 = vdwg.mxu0
        %v974 = vadd.f32 %v972, %v714
        %v975 = vxor.u32 %v974, 2147483648
        %v976 = vmul.f32 %v975, 1.442695
        %v977 = vpow.pop %v976
        %v978 = vadd.f32 %v977, 1.0
        %v979 = vrcp.pop %v978
        %v980 = vmul.f32 %v978, %v979
        %v981 = vsub.f32 1.0, %v980
        %v982 = vmul.f32 %v979, %v981
        %v983 = vadd.f32 %v979, %v982
        %vm984 = vweird.f32 %v978
        %vm985 = vweird.f32 %v979
        %vm986 = vmor %vm984, %vm985
        %v987 = vsel %vm986, %v979, %v983
        %v988 = vand.u32 2147483647, %v978
        %vm989 = vcmp.eq.f32.partialorder %v988, 8.507059e+37
        %v990 = vand.u32 %v978, 2147483648
        %v991 = vor.u32 1.1754944e-38, %v990
        %v992 = vsel %vm989, %v991, %v987
        %v993 = vmul.f32 1.0, %v992
        %995 = vrot.lane.b32.xlu0 %v974, 80
        %v996 = vpop.permute.xlu0 %995
        %v998 = vmul.f32 %v993, %v996
        %1000 = vrot.lane.b32.xlu0 %v998, 32
        %v1001 = vpop.permute.xlu0 %1000
        %v1003 = vadd.f32 %v974, %v1001
        %v1004 = vtanh.pop %v1003
        %v1005 = vsub.f32 1.0, %v993
        %1007 = vrot.lane.b32.xlu0 %v1004, 112
        %v1008 = vpop.permute.xlu0 %1007
        %v1010 = vmul.f32 %v1005, %v1008
        %v1011 = vmul.f32 %v993, %v862
        %v1012 = vadd.f32 %v1010, %v1011
        %s1013 = scalar_lea.vmem [#allocation2], 16
        %v1014 = vld [vmem:[%s1013] sm:$0xff]
        %1015 = vmatpush.msra.mxu0 0.0
        %1016 = vmatpush.msra.mxu0 0.0
        %1017 = vmatpush.msra.mxu0 0.0
        %1018 = vmatpush.msra.mxu0 0.0
        %1019 = vmatpush.msra.mxu0 0.0
        %1020 = vmatpush.msra.mxu0 0.0
        %1021 = vmatpush.msra.mxu0 0.0
        %1022 = vmatpush.msra.mxu0 0.0
        %1023 = vmatpush.msra.mxu0 0.0
        %1024 = vmatpush.msra.mxu0 0.0
        %1025 = vmatpush.msra.mxu0 0.0
        %1026 = vmatpush.msra.mxu0 0.0
        %1027 = vmatpush.msra.mxu0 0.0
        %1028 = vmatpush.msra.mxu0 0.0
        %1029 = vmatpush.msra.mxu0 %v703
        %1030 = vmatpush.msra.mxu0 %v702
        %1031 = vmatmul.f32.gmra.mxu0 %v952
        %v1032 = vpop.f32.mrf.mxu0
        %v1033 = vadd.f32 %v710, %v1032
        %1034 = vdwg.mxu0
        %v1035 = vadd.f32 %v1014, %v1033
        %v1036 = vxor.u32 %v1035, 2147483648
        %v1037 = vmul.f32 %v1036, 1.442695
        %v1038 = vpow.pop %v1037
        %v1039 = vadd.f32 %v1038, 1.0
        %v1040 = vrcp.pop %v1039
        %v1041 = vmul.f32 %v1039, %v1040
        %v1042 = vsub.f32 1.0, %v1041
        %v1043 = vmul.f32 %v1040, %v1042
        %v1044 = vadd.f32 %v1040, %v1043
        %vm1045 = vweird.f32 %v1039
        %vm1046 = vweird.f32 %v1040
        %vm1047 = vmor %vm1045, %vm1046
        %v1048 = vsel %vm1047, %v1040, %v1044
        %v1049 = vand.u32 2147483647, %v1039
        %vm1050 = vcmp.eq.f32.partialorder %v1049, 8.507059e+37
        %v1051 = vand.u32 %v1039, 2147483648
        %v1052 = vor.u32 1.1754944e-38, %v1051
        %v1053 = vsel %vm1050, %v1052, %v1048
        %v1054 = vmul.f32 1.0, %v1053
        %1056 = vrot.lane.b32.xlu0 %v1033, 96
        %v1057 = vpop.permute.xlu0 %1056
        %v1059 = vmul.f32 %v1054, %v1057
        %1061 = vrot.lane.b32.xlu0 %v1059, 32
        %v1062 = vpop.permute.xlu0 %1061
        %v1064 = vadd.f32 %v1014, %v1062
        %v1065 = vtanh.pop %v1064
        %v1066 = vsub.f32 1.0, %v1054
        %1068 = vrot.lane.b32.xlu0 %v1065, 112
        %v1069 = vpop.permute.xlu0 %1068
        %v1071 = vmul.f32 %v1066, %v1069
        %v1072 = vmul.f32 %v1054, %v923
        %v1073 = vadd.f32 %v1071, %v1072
        %1075 = vrot.lane.b32.xlu0 %v1012, 112
        %v1076 = vpop.permute.xlu0 %1075
        %v1077 = vsel %vm571, %v1076, 0
        %1079 = vmatpush.msra.mxu0 0.0
        %1080 = vmatpush.msra.mxu0 0.0
        %1081 = vmatpush.msra.mxu0 0.0
        %1082 = vmatpush.msra.mxu0 0.0
        %1083 = vmatpush.msra.mxu0 0.0
        %1084 = vmatpush.msra.mxu0 0.0
        %1085 = vmatpush.msra.mxu0 0.0
        %1086 = vmatpush.msra.mxu0 0.0
        %1087 = vmatpush.msra.mxu0 0.0
        %1088 = vmatpush.msra.mxu0 0.0
        %1089 = vmatpush.msra.mxu0 0.0
        %1090 = vmatpush.msra.mxu0 0.0
        %1091 = vmatpush.msra.mxu0 0.0
        %1092 = vmatpush.msra.mxu0 0.0
        %1093 = vmatpush.msra.mxu0 %v707
        %1094 = vmatpush.msra.mxu0 %v706
        %1095 = vmatmul.f32.gmra.mxu0 %v1077
        %v1096 = vpop.f32.mrf.mxu0
        %v1097 = vadd.f32 0.0, %v1096
        %1098 = vdwg.mxu0
        %1100 = vrot.lane.b32.xlu0 %v1073, 112
        %v1101 = vpop.permute.xlu0 %1100
        %v1102 = vsel %vm571, %v1101, 0
        %1104 = vmatpush.msra.mxu0 0.0
        %1105 = vmatpush.msra.mxu0 0.0
        %1106 = vmatpush.msra.mxu0 0.0
        %1107 = vmatpush.msra.mxu0 0.0
        %1108 = vmatpush.msra.mxu0 0.0
        %1109 = vmatpush.msra.mxu0 0.0
        %1110 = vmatpush.msra.mxu0 0.0
        %1111 = vmatpush.msra.mxu0 0.0
        %1112 = vmatpush.msra.mxu0 0.0
        %1113 = vmatpush.msra.mxu0 0.0
        %1114 = vmatpush.msra.mxu0 0.0
        %1115 = vmatpush.msra.mxu0 0.0
        %1116 = vmatpush.msra.mxu0 0.0
        %1117 = vmatpush.msra.mxu0 0.0
        %1118 = vmatpush.msra.mxu0 %v705
        %1119 = vmatpush.msra.mxu0 %v704
        %1120 = vmatmul.f32.gmra.mxu0 %v1102
        %v1121 = vpop.f32.mrf.mxu0
        %v1122 = vadd.f32 %v1097, %v1121
        %1123 = vdwg.mxu0
        %v1124 = vadd.f32 %v1122, %v714
        %v1125 = vxor.u32 %v1124, 2147483648
        %v1126 = vmul.f32 %v1125, 1.442695
        %v1127 = vpow.pop %v1126
        %v1128 = vadd.f32 %v1127, 1.0
        %v1129 = vrcp.pop %v1128
        %v1130 = vmul.f32 %v1128, %v1129
        %v1131 = vsub.f32 1.0, %v1130
        %v1132 = vmul.f32 %v1129, %v1131
        %v1133 = vadd.f32 %v1129, %v1132
        %vm1134 = vweird.f32 %v1128
        %vm1135 = vweird.f32 %v1129
        %vm1136 = vmor %vm1134, %vm1135
        %v1137 = vsel %vm1136, %v1129, %v1133
        %v1138 = vand.u32 2147483647, %v1128
        %vm1139 = vcmp.eq.f32.partialorder %v1138, 8.507059e+37
        %v1140 = vand.u32 %v1128, 2147483648
        %v1141 = vor.u32 1.1754944e-38, %v1140
        %v1142 = vsel %vm1139, %v1141, %v1137
        %v1143 = vmul.f32 1.0, %v1142
        %1145 = vrot.lane.b32.xlu0 %v1124, 80
        %v1146 = vpop.permute.xlu0 %1145
        %v1148 = vmul.f32 %v1143, %v1146
        %1150 = vrot.lane.b32.xlu0 %v1148, 32
        %v1151 = vpop.permute.xlu0 %1150
        %v1153 = vadd.f32 %v1124, %v1151
        %v1154 = vtanh.pop %v1153
        %v1155 = vsub.f32 1.0, %v1143
        %1157 = vrot.lane.b32.xlu0 %v1154, 112
        %v1158 = vpop.permute.xlu0 %1157
        %v1160 = vmul.f32 %v1155, %v1158
        %v1161 = vmul.f32 %v1143, %v1012
        %v1162 = vadd.f32 %v1160, %v1161
        %s1163 = scalar_lea.vmem [#allocation2], 24
        %v1164 = vld [vmem:[%s1163] sm:$0xff]
        %1165 = vmatpush.msra.mxu0 0.0
        %1166 = vmatpush.msra.mxu0 0.0
        %1167 = vmatpush.msra.mxu0 0.0
        %1168 = vmatpush.msra.mxu0 0.0
        %1169 = vmatpush.msra.mxu0 0.0
        %1170 = vmatpush.msra.mxu0 0.0
        %1171 = vmatpush.msra.mxu0 0.0
        %1172 = vmatpush.msra.mxu0 0.0
        %1173 = vmatpush.msra.mxu0 0.0
        %1174 = vmatpush.msra.mxu0 0.0
        %1175 = vmatpush.msra.mxu0 0.0
        %1176 = vmatpush.msra.mxu0 0.0
        %1177 = vmatpush.msra.mxu0 0.0
        %1178 = vmatpush.msra.mxu0 0.0
        %1179 = vmatpush.msra.mxu0 %v703
        %1180 = vmatpush.msra.mxu0 %v702
        %1181 = vmatmul.f32.gmra.mxu0 %v1102
        %v1182 = vpop.f32.mrf.mxu0
        %v1183 = vadd.f32 %v710, %v1182
        %1184 = vdwg.mxu0
        %v1185 = vadd.f32 %v1164, %v1183
        %v1186 = vxor.u32 %v1185, 2147483648
        %v1187 = vmul.f32 %v1186, 1.442695
        %v1188 = vpow.pop %v1187
        %v1189 = vadd.f32 %v1188, 1.0
        %v1190 = vrcp.pop %v1189
        %v1191 = vmul.f32 %v1189, %v1190
        %v1192 = vsub.f32 1.0, %v1191
        %v1193 = vmul.f32 %v1190, %v1192
        %v1194 = vadd.f32 %v1190, %v1193
        %vm1195 = vweird.f32 %v1189
        %vm1196 = vweird.f32 %v1190
        %vm1197 = vmor %vm1195, %vm1196
        %v1198 = vsel %vm1197, %v1190, %v1194
        %v1199 = vand.u32 2147483647, %v1189
        %vm1200 = vcmp.eq.f32.partialorder %v1199, 8.507059e+37
        %v1201 = vand.u32 %v1189, 2147483648
        %v1202 = vor.u32 1.1754944e-38, %v1201
        %v1203 = vsel %vm1200, %v1202, %v1198
        %v1204 = vmul.f32 1.0, %v1203
        %1206 = vrot.lane.b32.xlu0 %v1183, 96
        %v1207 = vpop.permute.xlu0 %1206
        %v1209 = vmul.f32 %v1204, %v1207
        %1211 = vrot.lane.b32.xlu0 %v1209, 32
        %v1212 = vpop.permute.xlu0 %1211
        %v1214 = vadd.f32 %v1164, %v1212
        %v1215 = vtanh.pop %v1214
        %v1216 = vsub.f32 1.0, %v1204
        %1218 = vrot.lane.b32.xlu0 %v1215, 112
        %v1219 = vpop.permute.xlu0 %1218
        %v1221 = vmul.f32 %v1216, %v1219
        %v1222 = vmul.f32 %v1204, %v1073
        %v1223 = vadd.f32 %v1221, %v1222
        %1225 = vrot.lane.b32.xlu0 %v1162, 112
        %v1226 = vpop.permute.xlu0 %1225
        %v1227 = vsel %vm571, %v1226, 0
        %1229 = vmatpush.msra.mxu0 0.0
        %1230 = vmatpush.msra.mxu0 0.0
        %1231 = vmatpush.msra.mxu0 0.0
        %1232 = vmatpush.msra.mxu0 0.0
        %1233 = vmatpush.msra.mxu0 0.0
        %1234 = vmatpush.msra.mxu0 0.0
        %1235 = vmatpush.msra.mxu0 0.0
        %1236 = vmatpush.msra.mxu0 0.0
        %1237 = vmatpush.msra.mxu0 0.0
        %1238 = vmatpush.msra.mxu0 0.0
        %1239 = vmatpush.msra.mxu0 0.0
        %1240 = vmatpush.msra.mxu0 0.0
        %1241 = vmatpush.msra.mxu0 0.0
        %1242 = vmatpush.msra.mxu0 0.0
        %1243 = vmatpush.msra.mxu0 %v707
        %1244 = vmatpush.msra.mxu0 %v706
        %1245 = vmatmul.f32.gmra.mxu0 %v1227
        %v1246 = vpop.f32.mrf.mxu0
        %v1247 = vadd.f32 0.0, %v1246
        %1248 = vdwg.mxu0
        %1250 = vrot.lane.b32.xlu0 %v1223, 112
        %v1251 = vpop.permute.xlu0 %1250
        %v1252 = vsel %vm571, %v1251, 0
        %1254 = vmatpush.msra.mxu0 0.0
        %1255 = vmatpush.msra.mxu0 0.0
        %1256 = vmatpush.msra.mxu0 0.0
        %1257 = vmatpush.msra.mxu0 0.0
        %1258 = vmatpush.msra.mxu0 0.0
        %1259 = vmatpush.msra.mxu0 0.0
        %1260 = vmatpush.msra.mxu0 0.0
        %1261 = vmatpush.msra.mxu0 0.0
        %1262 = vmatpush.msra.mxu0 0.0
        %1263 = vmatpush.msra.mxu0 0.0
        %1264 = vmatpush.msra.mxu0 0.0
        %1265 = vmatpush.msra.mxu0 0.0
        %1266 = vmatpush.msra.mxu0 0.0
        %1267 = vmatpush.msra.mxu0 0.0
        %1268 = vmatpush.msra.mxu0 %v705
        %1269 = vmatpush.msra.mxu0 %v704
        %1270 = vmatmul.f32.gmra.mxu0 %v1252
        %v1271 = vpop.f32.mrf.mxu0
        %v1272 = vadd.f32 %v1247, %v1271
        %1273 = vdwg.mxu0
        %v1274 = vadd.f32 %v1272, %v714
        %v1275 = vxor.u32 %v1274, 2147483648
        %v1276 = vmul.f32 %v1275, 1.442695
        %v1277 = vpow.pop %v1276
        %v1278 = vadd.f32 %v1277, 1.0
        %v1279 = vrcp.pop %v1278
        %v1280 = vmul.f32 %v1278, %v1279
        %v1281 = vsub.f32 1.0, %v1280
        %v1282 = vmul.f32 %v1279, %v1281
        %v1283 = vadd.f32 %v1279, %v1282
        %vm1284 = vweird.f32 %v1278
        %vm1285 = vweird.f32 %v1279
        %vm1286 = vmor %vm1284, %vm1285
        %v1287 = vsel %vm1286, %v1279, %v1283
        %v1288 = vand.u32 2147483647, %v1278
        %vm1289 = vcmp.eq.f32.partialorder %v1288, 8.507059e+37
        %v1290 = vand.u32 %v1278, 2147483648
        %v1291 = vor.u32 1.1754944e-38, %v1290
        %v1292 = vsel %vm1289, %v1291, %v1287
        %v1293 = vmul.f32 1.0, %v1292
        %1295 = vrot.lane.b32.xlu0 %v1274, 80
        %v1296 = vpop.permute.xlu0 %1295
        %v1298 = vmul.f32 %v1293, %v1296
        %1300 = vrot.lane.b32.xlu0 %v1298, 32
        %v1301 = vpop.permute.xlu0 %1300
        %v1303 = vadd.f32 %v1274, %v1301
        %v1304 = vtanh.pop %v1303
        %v1305 = vsub.f32 1.0, %v1293
        %1307 = vrot.lane.b32.xlu0 %v1304, 112
        %v1308 = vpop.permute.xlu0 %1307
        %v1310 = vmul.f32 %v1305, %v1308
        %v1311 = vmul.f32 %v1293, %v1162
        %v1312 = vadd.f32 %v1310, %v1311
        %s1313 = scalar_lea.vmem [#allocation2], 32
        %v1314 = vld [vmem:[%s1313] sm:$0xff]
        %1315 = vmatpush.msra.mxu0 0.0
        %1316 = vmatpush.msra.mxu0 0.0
        %1317 = vmatpush.msra.mxu0 0.0
        %1318 = vmatpush.msra.mxu0 0.0
        %1319 = vmatpush.msra.mxu0 0.0
        %1320 = vmatpush.msra.mxu0 0.0
        %1321 = vmatpush.msra.mxu0 0.0
        %1322 = vmatpush.msra.mxu0 0.0
        %1323 = vmatpush.msra.mxu0 0.0
        %1324 = vmatpush.msra.mxu0 0.0
        %1325 = vmatpush.msra.mxu0 0.0
        %1326 = vmatpush.msra.mxu0 0.0
        %1327 = vmatpush.msra.mxu0 0.0
        %1328 = vmatpush.msra.mxu0 0.0
        %1329 = vmatpush.msra.mxu0 %v703
        %1330 = vmatpush.msra.mxu0 %v702
        %1331 = vmatmul.f32.gmra.mxu0 %v1252
        %v1332 = vpop.f32.mrf.mxu0
        %v1333 = vadd.f32 %v710, %v1332
        %1334 = vdwg.mxu0
        %v1335 = vadd.f32 %v1314, %v1333
        %v1336 = vxor.u32 %v1335, 2147483648
        %v1337 = vmul.f32 %v1336, 1.442695
        %v1338 = vpow.pop %v1337
        %v1339 = vadd.f32 %v1338, 1.0
        %v1340 = vrcp.pop %v1339
        %v1341 = vmul.f32 %v1339, %v1340
        %v1342 = vsub.f32 1.0, %v1341
        %v1343 = vmul.f32 %v1340, %v1342
        %v1344 = vadd.f32 %v1340, %v1343
        %vm1345 = vweird.f32 %v1339
        %vm1346 = vweird.f32 %v1340
        %vm1347 = vmor %vm1345, %vm1346
        %v1348 = vsel %vm1347, %v1340, %v1344
        %v1349 = vand.u32 2147483647, %v1339
        %vm1350 = vcmp.eq.f32.partialorder %v1349, 8.507059e+37
        %v1351 = vand.u32 %v1339, 2147483648
        %v1352 = vor.u32 1.1754944e-38, %v1351
        %v1353 = vsel %vm1350, %v1352, %v1348
        %v1354 = vmul.f32 1.0, %v1353
        %1356 = vrot.lane.b32.xlu0 %v1333, 96
        %v1357 = vpop.permute.xlu0 %1356
        %v1359 = vmul.f32 %v1354, %v1357
        %1361 = vrot.lane.b32.xlu0 %v1359, 32
        %v1362 = vpop.permute.xlu0 %1361
        %v1364 = vadd.f32 %v1314, %v1362
        %v1365 = vtanh.pop %v1364
        %v1366 = vsub.f32 1.0, %v1354
        %1368 = vrot.lane.b32.xlu0 %v1365, 112
        %v1369 = vpop.permute.xlu0 %1368
        %v1371 = vmul.f32 %v1366, %v1369
        %v1372 = vmul.f32 %v1354, %v1223
        %v1373 = vadd.f32 %v1371, %v1372
        %1375 = vrot.lane.b32.xlu0 %v1312, 112
        %v1376 = vpop.permute.xlu0 %1375
        %v1377 = vsel %vm571, %v1376, 0
        %1379 = vmatpush.msra.mxu0 0.0
        %1380 = vmatpush.msra.mxu0 0.0
        %1381 = vmatpush.msra.mxu0 0.0
        %1382 = vmatpush.msra.mxu0 0.0
        %1383 = vmatpush.msra.mxu0 0.0
        %1384 = vmatpush.msra.mxu0 0.0
        %1385 = vmatpush.msra.mxu0 0.0
        %1386 = vmatpush.msra.mxu0 0.0
        %1387 = vmatpush.msra.mxu0 0.0
        %1388 = vmatpush.msra.mxu0 0.0
        %1389 = vmatpush.msra.mxu0 0.0
        %1390 = vmatpush.msra.mxu0 0.0
        %1391 = vmatpush.msra.mxu0 0.0
        %1392 = vmatpush.msra.mxu0 0.0
        %1393 = vmatpush.msra.mxu0 %v707
        %1394 = vmatpush.msra.mxu0 %v706
        %1395 = vmatmul.f32.gmra.mxu0 %v1377
        %v1396 = vpop.f32.mrf.mxu0
        %v1397 = vadd.f32 0.0, %v1396
        %1398 = vdwg.mxu0
        %1400 = vrot.lane.b32.xlu0 %v1373, 112
        %v1401 = vpop.permute.xlu0 %1400
        %v1402 = vsel %vm571, %v1401, 0
        %1404 = vmatpush.msra.mxu0 0.0
        %1405 = vmatpush.msra.mxu0 0.0
        %1406 = vmatpush.msra.mxu0 0.0
        %1407 = vmatpush.msra.mxu0 0.0
        %1408 = vmatpush.msra.mxu0 0.0
        %1409 = vmatpush.msra.mxu0 0.0
        %1410 = vmatpush.msra.mxu0 0.0
        %1411 = vmatpush.msra.mxu0 0.0
        %1412 = vmatpush.msra.mxu0 0.0
        %1413 = vmatpush.msra.mxu0 0.0
        %1414 = vmatpush.msra.mxu0 0.0
        %1415 = vmatpush.msra.mxu0 0.0
        %1416 = vmatpush.msra.mxu0 0.0
        %1417 = vmatpush.msra.mxu0 0.0
        %1418 = vmatpush.msra.mxu0 %v705
        %1419 = vmatpush.msra.mxu0 %v704
        %1420 = vmatmul.f32.gmra.mxu0 %v1402
        %v1421 = vpop.f32.mrf.mxu0
        %v1422 = vadd.f32 %v1397, %v1421
        %1423 = vdwg.mxu0
        %v1424 = vadd.f32 %v1422, %v714
        %v1425 = vxor.u32 %v1424, 2147483648
        %v1426 = vmul.f32 %v1425, 1.442695
        %v1427 = vpow.pop %v1426
        %v1428 = vadd.f32 %v1427, 1.0
        %v1429 = vrcp.pop %v1428
        %v1430 = vmul.f32 %v1428, %v1429
        %v1431 = vsub.f32 1.0, %v1430
        %v1432 = vmul.f32 %v1429, %v1431
        %v1433 = vadd.f32 %v1429, %v1432
        %vm1434 = vweird.f32 %v1428
        %vm1435 = vweird.f32 %v1429
        %vm1436 = vmor %vm1434, %vm1435
        %v1437 = vsel %vm1436, %v1429, %v1433
        %v1438 = vand.u32 2147483647, %v1428
        %vm1439 = vcmp.eq.f32.partialorder %v1438, 8.507059e+37
        %v1440 = vand.u32 %v1428, 2147483648
        %v1441 = vor.u32 1.1754944e-38, %v1440
        %v1442 = vsel %vm1439, %v1441, %v1437
        %v1443 = vmul.f32 1.0, %v1442
        %1445 = vrot.lane.b32.xlu0 %v1424, 80
        %v1446 = vpop.permute.xlu0 %1445
        %v1448 = vmul.f32 %v1443, %v1446
        %1450 = vrot.lane.b32.xlu0 %v1448, 32
        %v1451 = vpop.permute.xlu0 %1450
        %v1453 = vadd.f32 %v1424, %v1451
        %v1454 = vtanh.pop %v1453
        %v1455 = vsub.f32 1.0, %v1443
        %1457 = vrot.lane.b32.xlu0 %v1454, 112
        %v1458 = vpop.permute.xlu0 %1457
        %v1460 = vmul.f32 %v1455, %v1458
        %v1461 = vmul.f32 %v1443, %v1312
        %v1462 = vadd.f32 %v1460, %v1461
        %s1463 = scalar_lea.vmem [#allocation2], 40
        %v1464 = vld [vmem:[%s1463] sm:$0xff]
        %1465 = vmatpush.msra.mxu0 0.0
        %1466 = vmatpush.msra.mxu0 0.0
        %1467 = vmatpush.msra.mxu0 0.0
        %1468 = vmatpush.msra.mxu0 0.0
        %1469 = vmatpush.msra.mxu0 0.0
        %1470 = vmatpush.msra.mxu0 0.0
        %1471 = vmatpush.msra.mxu0 0.0
        %1472 = vmatpush.msra.mxu0 0.0
        %1473 = vmatpush.msra.mxu0 0.0
        %1474 = vmatpush.msra.mxu0 0.0
        %1475 = vmatpush.msra.mxu0 0.0
        %1476 = vmatpush.msra.mxu0 0.0
        %1477 = vmatpush.msra.mxu0 0.0
        %1478 = vmatpush.msra.mxu0 0.0
        %1479 = vmatpush.msra.mxu0 %v703
        %1480 = vmatpush.msra.mxu0 %v702
        %1481 = vmatmul.f32.gmra.mxu0 %v1402
        %v1482 = vpop.f32.mrf.mxu0
        %v1483 = vadd.f32 %v710, %v1482
        %1484 = vdwg.mxu0
        %v1485 = vadd.f32 %v1464, %v1483
        %v1486 = vxor.u32 %v1485, 2147483648
        %v1487 = vmul.f32 %v1486, 1.442695
        %v1488 = vpow.pop %v1487
        %v1489 = vadd.f32 %v1488, 1.0
        %v1490 = vrcp.pop %v1489
        %v1491 = vmul.f32 %v1489, %v1490
        %v1492 = vsub.f32 1.0, %v1491
        %v1493 = vmul.f32 %v1490, %v1492
        %v1494 = vadd.f32 %v1490, %v1493
        %vm1495 = vweird.f32 %v1489
        %vm1496 = vweird.f32 %v1490
        %vm1497 = vmor %vm1495, %vm1496
        %v1498 = vsel %vm1497, %v1490, %v1494
        %v1499 = vand.u32 2147483647, %v1489
        %vm1500 = vcmp.eq.f32.partialorder %v1499, 8.507059e+37
        %v1501 = vand.u32 %v1489, 2147483648
        %v1502 = vor.u32 1.1754944e-38, %v1501
        %v1503 = vsel %vm1500, %v1502, %v1498
        %v1504 = vmul.f32 1.0, %v1503
        %1506 = vrot.lane.b32.xlu0 %v1483, 96
        %v1507 = vpop.permute.xlu0 %1506
        %v1509 = vmul.f32 %v1504, %v1507
        %1511 = vrot.lane.b32.xlu0 %v1509, 32
        %v1512 = vpop.permute.xlu0 %1511
        %v1514 = vadd.f32 %v1464, %v1512
        %v1515 = vtanh.pop %v1514
        %v1516 = vsub.f32 1.0, %v1504
        %1518 = vrot.lane.b32.xlu0 %v1515, 112
        %v1519 = vpop.permute.xlu0 %1518
        %v1521 = vmul.f32 %v1516, %v1519
        %v1522 = vmul.f32 %v1504, %v1373
        %v1523 = vadd.f32 %v1521, %v1522
        %1525 = vrot.lane.b32.xlu0 %v1462, 112
        %v1526 = vpop.permute.xlu0 %1525
        %v1527 = vsel %vm571, %v1526, 0
        %1529 = vmatpush.msra.mxu0 0.0
        %1530 = vmatpush.msra.mxu0 0.0
        %1531 = vmatpush.msra.mxu0 0.0
        %1532 = vmatpush.msra.mxu0 0.0
        %1533 = vmatpush.msra.mxu0 0.0
        %1534 = vmatpush.msra.mxu0 0.0
        %1535 = vmatpush.msra.mxu0 0.0
        %1536 = vmatpush.msra.mxu0 0.0
        %1537 = vmatpush.msra.mxu0 0.0
        %1538 = vmatpush.msra.mxu0 0.0
        %1539 = vmatpush.msra.mxu0 0.0
        %1540 = vmatpush.msra.mxu0 0.0
        %1541 = vmatpush.msra.mxu0 0.0
        %1542 = vmatpush.msra.mxu0 0.0
        %1543 = vmatpush.msra.mxu0 %v707
        %1544 = vmatpush.msra.mxu0 %v706
        %1545 = vmatmul.f32.gmra.mxu0 %v1527
        %v1546 = vpop.f32.mrf.mxu0
        %v1547 = vadd.f32 0.0, %v1546
        %1548 = vdwg.mxu0
        %1550 = vrot.lane.b32.xlu0 %v1523, 112
        %v1551 = vpop.permute.xlu0 %1550
        %v1552 = vsel %vm571, %v1551, 0
        %1554 = vmatpush.msra.mxu0 0.0
        %1555 = vmatpush.msra.mxu0 0.0
        %1556 = vmatpush.msra.mxu0 0.0
        %1557 = vmatpush.msra.mxu0 0.0
        %1558 = vmatpush.msra.mxu0 0.0
        %1559 = vmatpush.msra.mxu0 0.0
        %1560 = vmatpush.msra.mxu0 0.0
        %1561 = vmatpush.msra.mxu0 0.0
        %1562 = vmatpush.msra.mxu0 0.0
        %1563 = vmatpush.msra.mxu0 0.0
        %1564 = vmatpush.msra.mxu0 0.0
        %1565 = vmatpush.msra.mxu0 0.0
        %1566 = vmatpush.msra.mxu0 0.0
        %1567 = vmatpush.msra.mxu0 0.0
        %1568 = vmatpush.msra.mxu0 %v705
        %1569 = vmatpush.msra.mxu0 %v704
        %1570 = vmatmul.f32.gmra.mxu0 %v1552
        %v1571 = vpop.f32.mrf.mxu0
        %v1572 = vadd.f32 %v1547, %v1571
        %1573 = vdwg.mxu0
        %v1574 = vadd.f32 %v1572, %v714
        %v1575 = vxor.u32 %v1574, 2147483648
        %v1576 = vmul.f32 %v1575, 1.442695
        %v1577 = vpow.pop %v1576
        %v1578 = vadd.f32 %v1577, 1.0
        %v1579 = vrcp.pop %v1578
        %v1580 = vmul.f32 %v1578, %v1579
        %v1581 = vsub.f32 1.0, %v1580
        %v1582 = vmul.f32 %v1579, %v1581
        %v1583 = vadd.f32 %v1579, %v1582
        %vm1584 = vweird.f32 %v1578
        %vm1585 = vweird.f32 %v1579
        %vm1586 = vmor %vm1584, %vm1585
        %v1587 = vsel %vm1586, %v1579, %v1583
        %v1588 = vand.u32 2147483647, %v1578
        %vm1589 = vcmp.eq.f32.partialorder %v1588, 8.507059e+37
        %v1590 = vand.u32 %v1578, 2147483648
        %v1591 = vor.u32 1.1754944e-38, %v1590
        %v1592 = vsel %vm1589, %v1591, %v1587
        %v1593 = vmul.f32 1.0, %v1592
        %1595 = vrot.lane.b32.xlu0 %v1574, 80
        %v1596 = vpop.permute.xlu0 %1595
        %v1598 = vmul.f32 %v1593, %v1596
        %1600 = vrot.lane.b32.xlu0 %v1598, 32
        %v1601 = vpop.permute.xlu0 %1600
        %v1603 = vadd.f32 %v1574, %v1601
        %v1604 = vtanh.pop %v1603
        %v1605 = vsub.f32 1.0, %v1593
        %1607 = vrot.lane.b32.xlu0 %v1604, 112
        %v1608 = vpop.permute.xlu0 %1607
        %v1610 = vmul.f32 %v1605, %v1608
        %v1611 = vmul.f32 %v1593, %v1462
        %v1612 = vadd.f32 %v1610, %v1611
        %s1613 = scalar_lea.vmem [#allocation2], 48
        %v1614 = vld [vmem:[%s1613] sm:$0xff]
        %1615 = vmatpush.msra.mxu0 0.0
        %1616 = vmatpush.msra.mxu0 0.0
        %1617 = vmatpush.msra.mxu0 0.0
        %1618 = vmatpush.msra.mxu0 0.0
        %1619 = vmatpush.msra.mxu0 0.0
        %1620 = vmatpush.msra.mxu0 0.0
        %1621 = vmatpush.msra.mxu0 0.0
        %1622 = vmatpush.msra.mxu0 0.0
        %1623 = vmatpush.msra.mxu0 0.0
        %1624 = vmatpush.msra.mxu0 0.0
        %1625 = vmatpush.msra.mxu0 0.0
        %1626 = vmatpush.msra.mxu0 0.0
        %1627 = vmatpush.msra.mxu0 0.0
        %1628 = vmatpush.msra.mxu0 0.0
        %1629 = vmatpush.msra.mxu0 %v703
        %1630 = vmatpush.msra.mxu0 %v702
        %1631 = vmatmul.f32.gmra.mxu0 %v1552
        %v1632 = vpop.f32.mrf.mxu0
        %v1633 = vadd.f32 %v710, %v1632
        %1634 = vdwg.mxu0
        %v1635 = vadd.f32 %v1614, %v1633
        %v1636 = vxor.u32 %v1635, 2147483648
        %v1637 = vmul.f32 %v1636, 1.442695
        %v1638 = vpow.pop %v1637
        %v1639 = vadd.f32 %v1638, 1.0
        %v1640 = vrcp.pop %v1639
        %v1641 = vmul.f32 %v1639, %v1640
        %v1642 = vsub.f32 1.0, %v1641
        %v1643 = vmul.f32 %v1640, %v1642
        %v1644 = vadd.f32 %v1640, %v1643
        %vm1645 = vweird.f32 %v1639
        %vm1646 = vweird.f32 %v1640
        %vm1647 = vmor %vm1645, %vm1646
        %v1648 = vsel %vm1647, %v1640, %v1644
        %v1649 = vand.u32 2147483647, %v1639
        %vm1650 = vcmp.eq.f32.partialorder %v1649, 8.507059e+37
        %v1651 = vand.u32 %v1639, 2147483648
        %v1652 = vor.u32 1.1754944e-38, %v1651
        %v1653 = vsel %vm1650, %v1652, %v1648
        %v1654 = vmul.f32 1.0, %v1653
        %1656 = vrot.lane.b32.xlu0 %v1633, 96
        %v1657 = vpop.permute.xlu0 %1656
        %v1659 = vmul.f32 %v1654, %v1657
        %1661 = vrot.lane.b32.xlu0 %v1659, 32
        %v1662 = vpop.permute.xlu0 %1661
        %v1664 = vadd.f32 %v1614, %v1662
        %v1665 = vtanh.pop %v1664
        %v1666 = vsub.f32 1.0, %v1654
        %1668 = vrot.lane.b32.xlu0 %v1665, 112
        %v1669 = vpop.permute.xlu0 %1668
        %v1671 = vmul.f32 %v1666, %v1669
        %v1672 = vmul.f32 %v1654, %v1523
        %v1673 = vadd.f32 %v1671, %v1672
        %1675 = vrot.lane.b32.xlu0 %v1612, 112
        %v1676 = vpop.permute.xlu0 %1675
        %v1677 = vsel %vm571, %v1676, 0
        %1679 = vmatpush.msra.mxu0 0.0
        %1680 = vmatpush.msra.mxu0 0.0
        %1681 = vmatpush.msra.mxu0 0.0
        %1682 = vmatpush.msra.mxu0 0.0
        %1683 = vmatpush.msra.mxu0 0.0
        %1684 = vmatpush.msra.mxu0 0.0
        %1685 = vmatpush.msra.mxu0 0.0
        %1686 = vmatpush.msra.mxu0 0.0
        %1687 = vmatpush.msra.mxu0 0.0
        %1688 = vmatpush.msra.mxu0 0.0
        %1689 = vmatpush.msra.mxu0 0.0
        %1690 = vmatpush.msra.mxu0 0.0
        %1691 = vmatpush.msra.mxu0 0.0
        %1692 = vmatpush.msra.mxu0 0.0
        %1693 = vmatpush.msra.mxu0 %v707
        %1694 = vmatpush.msra.mxu0 %v706
        %1695 = vmatmul.f32.gmra.mxu0 %v1677
        %v1696 = vpop.f32.mrf.mxu0
        %v1697 = vadd.f32 0.0, %v1696
        %1698 = vdwg.mxu0
        %1700 = vrot.lane.b32.xlu0 %v1673, 112
        %v1701 = vpop.permute.xlu0 %1700
        %v1702 = vsel %vm571, %v1701, 0
        %1704 = vmatpush.msra.mxu0 0.0
        %1705 = vmatpush.msra.mxu0 0.0
        %1706 = vmatpush.msra.mxu0 0.0
        %1707 = vmatpush.msra.mxu0 0.0
        %1708 = vmatpush.msra.mxu0 0.0
        %1709 = vmatpush.msra.mxu0 0.0
        %1710 = vmatpush.msra.mxu0 0.0
        %1711 = vmatpush.msra.mxu0 0.0
        %1712 = vmatpush.msra.mxu0 0.0
        %1713 = vmatpush.msra.mxu0 0.0
        %1714 = vmatpush.msra.mxu0 0.0
        %1715 = vmatpush.msra.mxu0 0.0
        %1716 = vmatpush.msra.mxu0 0.0
        %1717 = vmatpush.msra.mxu0 0.0
        %1718 = vmatpush.msra.mxu0 %v705
        %1719 = vmatpush.msra.mxu0 %v704
        %1720 = vmatmul.f32.gmra.mxu0 %v1702
        %v1721 = vpop.f32.mrf.mxu0
        %v1722 = vadd.f32 %v1697, %v1721
        %1723 = vdwg.mxu0
        %v1724 = vadd.f32 %v1722, %v714
        %v1725 = vxor.u32 %v1724, 2147483648
        %v1726 = vmul.f32 %v1725, 1.442695
        %v1727 = vpow.pop %v1726
        %v1728 = vadd.f32 %v1727, 1.0
        %v1729 = vrcp.pop %v1728
        %v1730 = vmul.f32 %v1728, %v1729
        %v1731 = vsub.f32 1.0, %v1730
        %v1732 = vmul.f32 %v1729, %v1731
        %v1733 = vadd.f32 %v1729, %v1732
        %vm1734 = vweird.f32 %v1728
        %vm1735 = vweird.f32 %v1729
        %vm1736 = vmor %vm1734, %vm1735
        %v1737 = vsel %vm1736, %v1729, %v1733
        %v1738 = vand.u32 2147483647, %v1728
        %vm1739 = vcmp.eq.f32.partialorder %v1738, 8.507059e+37
        %v1740 = vand.u32 %v1728, 2147483648
        %v1741 = vor.u32 1.1754944e-38, %v1740
        %v1742 = vsel %vm1739, %v1741, %v1737
        %v1743 = vmul.f32 1.0, %v1742
        %1745 = vrot.lane.b32.xlu0 %v1724, 80
        %v1746 = vpop.permute.xlu0 %1745
        %v1748 = vmul.f32 %v1743, %v1746
        %1750 = vrot.lane.b32.xlu0 %v1748, 32
        %v1751 = vpop.permute.xlu0 %1750
        %v1753 = vadd.f32 %v1724, %v1751
        %v1754 = vtanh.pop %v1753
        %v1755 = vsub.f32 1.0, %v1743
        %1757 = vrot.lane.b32.xlu0 %v1754, 112
        %v1758 = vpop.permute.xlu0 %1757
        %v1760 = vmul.f32 %v1755, %v1758
        %v1761 = vmul.f32 %v1743, %v1612
        %v1762 = vadd.f32 %v1760, %v1761
        %s1763 = scalar_lea.vmem [#allocation2], 56
        %v1764 = vld [vmem:[%s1763] sm:$0xff]
        %1765 = vmatpush.msra.mxu0 0.0
        %1766 = vmatpush.msra.mxu0 0.0
        %1767 = vmatpush.msra.mxu0 0.0
        %1768 = vmatpush.msra.mxu0 0.0
        %1769 = vmatpush.msra.mxu0 0.0
        %1770 = vmatpush.msra.mxu0 0.0
        %1771 = vmatpush.msra.mxu0 0.0
        %1772 = vmatpush.msra.mxu0 0.0
        %1773 = vmatpush.msra.mxu0 0.0
        %1774 = vmatpush.msra.mxu0 0.0
        %1775 = vmatpush.msra.mxu0 0.0
        %1776 = vmatpush.msra.mxu0 0.0
        %1777 = vmatpush.msra.mxu0 0.0
        %1778 = vmatpush.msra.mxu0 0.0
        %1779 = vmatpush.msra.mxu0 %v703
        %1780 = vmatpush.msra.mxu0 %v702
        %1781 = vmatmul.f32.gmra.mxu0 %v1702
        %v1782 = vpop.f32.mrf.mxu0
        %v1783 = vadd.f32 %v710, %v1782
        %1784 = vdwg.mxu0
        %v1785 = vadd.f32 %v1764, %v1783
        %v1786 = vxor.u32 %v1785, 2147483648
        %v1787 = vmul.f32 %v1786, 1.442695
        %v1788 = vpow.pop %v1787
        %v1789 = vadd.f32 %v1788, 1.0
        %v1790 = vrcp.pop %v1789
        %v1791 = vmul.f32 %v1789, %v1790
        %v1792 = vsub.f32 1.0, %v1791
        %v1793 = vmul.f32 %v1790, %v1792
        %v1794 = vadd.f32 %v1790, %v1793
        %vm1795 = vweird.f32 %v1789
        %vm1796 = vweird.f32 %v1790
        %vm1797 = vmor %vm1795, %vm1796
        %v1798 = vsel %vm1797, %v1790, %v1794
        %v1799 = vand.u32 2147483647, %v1789
        %vm1800 = vcmp.eq.f32.partialorder %v1799, 8.507059e+37
        %v1801 = vand.u32 %v1789, 2147483648
        %v1802 = vor.u32 1.1754944e-38, %v1801
        %v1803 = vsel %vm1800, %v1802, %v1798
        %v1804 = vmul.f32 1.0, %v1803
        %1806 = vrot.lane.b32.xlu0 %v1783, 96
        %v1807 = vpop.permute.xlu0 %1806
        %v1809 = vmul.f32 %v1804, %v1807
        %1811 = vrot.lane.b32.xlu0 %v1809, 32
        %v1812 = vpop.permute.xlu0 %1811
        %v1814 = vadd.f32 %v1764, %v1812
        %v1815 = vtanh.pop %v1814
        %v1816 = vsub.f32 1.0, %v1804
        %1818 = vrot.lane.b32.xlu0 %v1815, 112
        %v1819 = vpop.permute.xlu0 %1818
        %v1821 = vmul.f32 %v1816, %v1819
        %v1822 = vmul.f32 %v1804, %v1673
        %v1823 = vadd.f32 %v1821, %v1822
        %1825 = vrot.lane.b32.xlu0 %v1762, 112
        %v1826 = vpop.permute.xlu0 %1825
        %v1827 = vsel %vm571, %v1826, 0
        %1829 = vmatpush.msra.mxu0 0.0
        %1830 = vmatpush.msra.mxu0 0.0
        %1831 = vmatpush.msra.mxu0 0.0
        %1832 = vmatpush.msra.mxu0 0.0
        %1833 = vmatpush.msra.mxu0 0.0
        %1834 = vmatpush.msra.mxu0 0.0
        %1835 = vmatpush.msra.mxu0 0.0
        %1836 = vmatpush.msra.mxu0 0.0
        %1837 = vmatpush.msra.mxu0 0.0
        %1838 = vmatpush.msra.mxu0 0.0
        %1839 = vmatpush.msra.mxu0 0.0
        %1840 = vmatpush.msra.mxu0 0.0
        %1841 = vmatpush.msra.mxu0 0.0
        %1842 = vmatpush.msra.mxu0 0.0
        %1843 = vmatpush.msra.mxu0 %v707
        %1844 = vmatpush.msra.mxu0 %v706
        %1845 = vmatmul.f32.gmra.mxu0 %v1827
        %v1846 = vpop.f32.mrf.mxu0
        %v1847 = vadd.f32 0.0, %v1846
        %1848 = vdwg.mxu0
        %1850 = vrot.lane.b32.xlu0 %v1823, 112
        %v1851 = vpop.permute.xlu0 %1850
        %v1852 = vsel %vm571, %v1851, 0
        %1854 = vmatpush.msra.mxu0 0.0
        %1855 = vmatpush.msra.mxu0 0.0
        %1856 = vmatpush.msra.mxu0 0.0
        %1857 = vmatpush.msra.mxu0 0.0
        %1858 = vmatpush.msra.mxu0 0.0
        %1859 = vmatpush.msra.mxu0 0.0
        %1860 = vmatpush.msra.mxu0 0.0
        %1861 = vmatpush.msra.mxu0 0.0
        %1862 = vmatpush.msra.mxu0 0.0
        %1863 = vmatpush.msra.mxu0 0.0
        %1864 = vmatpush.msra.mxu0 0.0
        %1865 = vmatpush.msra.mxu0 0.0
        %1866 = vmatpush.msra.mxu0 0.0
        %1867 = vmatpush.msra.mxu0 0.0
        %1868 = vmatpush.msra.mxu0 %v705
        %1869 = vmatpush.msra.mxu0 %v704
        %1870 = vmatmul.f32.gmra.mxu0 %v1852
        %v1871 = vpop.f32.mrf.mxu0
        %v1872 = vadd.f32 %v1847, %v1871
        %1873 = vdwg.mxu0
        %v1874 = vadd.f32 %v1872, %v714
        %v1875 = vxor.u32 %v1874, 2147483648
        %v1876 = vmul.f32 %v1875, 1.442695
        %v1877 = vpow.pop %v1876
        %v1878 = vadd.f32 %v1877, 1.0
        %v1879 = vrcp.pop %v1878
        %v1880 = vmul.f32 %v1878, %v1879
        %v1881 = vsub.f32 1.0, %v1880
        %v1882 = vmul.f32 %v1879, %v1881
        %v1883 = vadd.f32 %v1879, %v1882
        %vm1884 = vweird.f32 %v1878
        %vm1885 = vweird.f32 %v1879
        %vm1886 = vmor %vm1884, %vm1885
        %v1887 = vsel %vm1886, %v1879, %v1883
        %v1888 = vand.u32 2147483647, %v1878
        %vm1889 = vcmp.eq.f32.partialorder %v1888, 8.507059e+37
        %v1890 = vand.u32 %v1878, 2147483648
        %v1891 = vor.u32 1.1754944e-38, %v1890
        %v1892 = vsel %vm1889, %v1891, %v1887
        %v1893 = vmul.f32 1.0, %v1892
        %1895 = vrot.lane.b32.xlu0 %v1874, 80
        %v1896 = vpop.permute.xlu0 %1895
        %v1898 = vmul.f32 %v1893, %v1896
        %1900 = vrot.lane.b32.xlu0 %v1898, 32
        %v1901 = vpop.permute.xlu0 %1900
        %v1903 = vadd.f32 %v1874, %v1901
        %v1904 = vtanh.pop %v1903
        %v1905 = vsub.f32 1.0, %v1893
        %1907 = vrot.lane.b32.xlu0 %v1904, 112
        %v1908 = vpop.permute.xlu0 %1907
        %v1910 = vmul.f32 %v1905, %v1908
        %v1911 = vmul.f32 %v1893, %v1762
        %v1912 = vadd.f32 %v1910, %v1911
        %v1913 = vld [vmem:[%s1] sm:$0xff]
        %v1914 = vld [vmem:[%s15] sm:$0xff]
        %v1915 = vld [vmem:[%s15 + $0x8] sm:$0xff]
        %v1916 = vld [vmem:[%s16] sm:$0x1]
        %v1918 = vperm.slane %v1916, 0
        %v1921 = vsel %vm571, %v1913, 0
        %1923 = vmatpush.msra.mxu0 0.0
        %1924 = vmatpush.msra.mxu0 0.0
        %1925 = vmatpush.msra.mxu0 0.0
        %1926 = vmatpush.msra.mxu0 0.0
        %1927 = vmatpush.msra.mxu0 0.0
        %1928 = vmatpush.msra.mxu0 0.0
        %1929 = vmatpush.msra.mxu0 0.0
        %1930 = vmatpush.msra.mxu0 0.0
        %1931 = vmatpush.msra.mxu0 0.0
        %1932 = vmatpush.msra.mxu0 0.0
        %1933 = vmatpush.msra.mxu0 0.0
        %1934 = vmatpush.msra.mxu0 0.0
        %1935 = vmatpush.msra.mxu0 0.0
        %1936 = vmatpush.msra.mxu0 0.0
        %1937 = vmatpush.msra.mxu0 %v1915
        %1938 = vmatpush.msra.mxu0 %v1914
        %1939 = vmatmul.f32.gmra.mxu0 %v1921
        %v1940 = vpop.f32.mrf.mxu0
        %v1941 = vadd.f32 %v1918, %v1940
        %1942 = vdwg.mxu0
        %vm1943 = vcmask 64512
        %1944 = vst.msk [vmem:[%s17] sm:$0xff] %vm1943, %v1941
        %1946 = vrot.lane.b32.xlu0 %v1912, 112
        %v1947 = vpop.permute.xlu0 %1946
        %1949 = vst.msk [vmem:[%s18] sm:$0xff] %vm571, %v1947
      $region92: #{cf_encoder_com_forward.1} parent=87 // pred_fallthru
        _
      // Predicated region
      $region93: #{cf_encoder_com_forward.1} parent=87 // pred_check
        %p1950 = pneg %p405
      $region94: #{cf_encoder_com_forward.1} parent=87 // pred_check_branch
        %1952 = sbr.rel (%p1950) target = $region96
      $region95: #{cf_encoder_com_forward.1} parent=87 // pred_region
        _
      $region96: #{cf_encoder_com_forward.1} parent=87 // pred_fallthru
        _
      // Predicated region
      $region97: #{cf_encoder_com_forward.1} parent=87 // pred_check
        %p1953 = pneg %p426
      $region98: #{cf_encoder_com_forward.1} parent=87 // pred_check_branch
        %1955 = sbr.rel (%p1953) target = $region100
      $region99: #{cf_encoder_com_forward.1} parent=87 // pred_region
        _
      $region100: #{cf_encoder_com_forward.1} parent=87 // pred_fallthru
        _
      // Predicated region
      $region101: #{cf_encoder_com_forward.1} parent=87 // pred_check
        %p1956 = pneg %p405
      $region102: #{cf_encoder_com_forward.1} parent=87 // pred_check_branch
        %1958 = sbr.rel (%p1956) target = $region104
      $region103: #{cf_encoder_com_forward.1} parent=87 // pred_region
        _
      $region104: #{cf_encoder_com_forward.1} parent=87 // pred_fallthru
        _
      // Predicated region
      $region105: #{cf_encoder_com_forward.1} parent=87 // pred_check
        %p1959 = pneg %p426
      $region106: #{cf_encoder_com_forward.1} parent=87 // pred_check_branch
        %1961 = sbr.rel (%p1959) target = $region108
      $region107: #{cf_encoder_com_forward.1} parent=87 // pred_region
        _
      $region108: #{cf_encoder_com_forward.1} parent=87 // pred_fallthru
        _
    $region88: #{cf_encoder_com_forward.1} parent=5 // pred_fallthru
      _
    %p1962 = scmp.le.s32.totalorder 2, %s25
    // Predicated region
    $region109: #{cf_encoder_com_forward.1} parent=5 // pred_check
      %p1963 = pneg %p1962
    $region110: #{cf_encoder_com_forward.1} parent=5 // pred_check_branch
      %1965 = sbr.rel (%p1963) target = $region112
    $region111: #{cf_encoder_com_forward.1} parent=5 // pred_region
      %s1966 = ssub.s32 %s25, 2
    $region112: #{cf_encoder_com_forward.1} parent=5 // pred_fallthru
      _
  $region6: #{cf_encoder_com_forward.1} parent=0 // loop_footer
    %s29 = sadd.s32 1, %s25
  $region7: #{cf_encoder_com_forward.1} parent=0 // loop_footer_branch
    %24 = sbr.rel target = $region3
  $region8: #{cf_encoder_com_forward.1} parent=0 // loop_exit
    _

</llo_original>
